<compile_context>
chip_gen: v6e
topology: v6e:2x2x1
jax: 0.10.0
libtpu: 0.0.40
codegen_flags: <defaults>
</compile_context>

<pallas_src>
import functools

import jax
import jax.numpy as jnp
from jax.experimental import pallas as pl
from jax.experimental.pallas import tpu as pltpu

EPS = 1e-5
BF16 = jnp.bfloat16
F32 = jnp.float32
VMEM_CAP = 48 * 1024 * 1024


def row_tile(H, W):
    """Rows per grid step: smallest divisor of H keeping M = TH*W >= 256."""
    th = H
    while th > 2 and H % (th // 2) == 0 and (th // 2) * W >= 256:
        th //= 2
    return th


# ---------------------------------------------------------------------------
# 3x3 stride-1 "same" conv, row-blocked, fused bias + ReLU/PReLU, optional
# folded input transform (channel-attention scale or previous-layer BatchNorm
# affine) and BatchNorm partial statistics output.
# ---------------------------------------------------------------------------
@functools.lru_cache(maxsize=None)
def _conv3x3_call(N, H, W, Cin, Cout, TH, act, in_tf, want_stats):
    HB = H // TH
    M = TH * W

    in_specs = [
        pl.BlockSpec((1, TH, W, Cin), lambda n, h: (n, h, 0, 0)),
        pl.BlockSpec((1, 1, W, Cin),
                     lambda n, h: (n, jnp.maximum(h * TH - 1, 0), 0, 0)),
        pl.BlockSpec((1, 1, W, Cin),
                     lambda n, h: (n, jnp.minimum((h + 1) * TH, H - 1), 0, 0)),
        pl.BlockSpec((3, 3 * Cin, Cout), lambda n, h: (0, 0, 0)),
        pl.BlockSpec((1, Cout), lambda n, h: (0, 0)),
    ]
    if act == "prelu":
        in_specs.append(pl.BlockSpec(memory_space=pltpu.MemorySpace.SMEM))
    if in_tf == "ca":
        in_specs.append(pl.BlockSpec((1, 1, Cin), lambda n, h: (n, 0, 0)))
    elif in_tf == "bn":
        in_specs.append(pl.BlockSpec((1, Cin), lambda n, h: (0, 0)))
        in_specs.append(pl.BlockSpec((1, Cin), lambda n, h: (0, 0)))

    out_shape = [jax.ShapeDtypeStruct((N, H, W, Cout), BF16)]
    out_specs = [pl.BlockSpec((1, TH, W, Cout), lambda n, h: (n, h, 0, 0))]
    if want_stats:
        out_shape.append(jax.ShapeDtypeStruct((N, HB, 2, Cout), F32))
        out_specs.append(pl.BlockSpec((1, 1, 2, Cout), lambda n, h: (n, h, 0, 0)))

    def kernel(*refs):
        xm_ref, xt_ref, xb_ref, w_ref, b_ref = refs[:5]
        i = 5
        alpha_ref = ca_ref = sc_ref = sh_ref = None
        if act == "prelu":
            alpha_ref = refs[i]; i += 1
        if in_tf == "ca":
            ca_ref = refs[i]; i += 1
        elif in_tf == "bn":
            sc_ref, sh_ref = refs[i], refs[i + 1]; i += 2
        y_ref = refs[i]; i += 1
        stats_ref = refs[i] if want_stats else None

        h = pl.program_id(1)

        def load_tf(ref):
            v = ref[0].astype(F32)                         # (R, W, Cin)
            if in_tf == "ca":
                v = v * ca_ref[0]
            elif in_tf == "bn":
                v = v * sc_ref[...] + sh_ref[...]
            return v

        gate_t = (h > 0).astype(F32)                       # zero pad row at top edge
        gate_b = (h < HB - 1).astype(F32)                  # zero pad row at bottom edge
        top = (load_tf(xt_ref) * gate_t).astype(BF16)      # (1, W, Cin)
        bot = (load_tf(xb_ref) * gate_b).astype(BF16)      # (1, W, Cin)
        if in_tf == "none":
            mid = xm_ref[0]                                # (TH, W, Cin) bf16
        else:
            mid = load_tf(xm_ref).astype(BF16)
        rows = jnp.concatenate([top, mid, bot], axis=0)    # (TH+2, W, Cin)
        zcol = jnp.zeros((TH + 2, 1, Cin), BF16)
        win = jnp.concatenate([zcol, rows, zcol], axis=1)  # (TH+2, W+2, Cin)

        acc = jnp.zeros((M, Cout), F32)
        for dy in range(3):
            rdy = win[dy:dy + TH]                          # (TH, W+2, Cin)
            slab = jnp.concatenate(
                [rdy[:, dx:dx + W, :] for dx in range(3)], axis=-1
            ).reshape(M, 3 * Cin)
            acc = acc + jnp.dot(slab, w_ref[dy], preferred_element_type=F32)
        y = acc + b_ref[...]
        if act == "relu":
            y = jnp.maximum(y, 0.0)
        else:  # prelu
            a = alpha_ref[0]
            y = jnp.where(y >= 0.0, y, y * a)
        y_ref[0] = y.reshape(TH, W, Cout).astype(BF16)
        if want_stats:
            s = jnp.sum(y, axis=0, keepdims=True)
            ss = jnp.sum(y * y, axis=0, keepdims=True)
            stats_ref[0, 0] = jnp.concatenate([s, ss], axis=0)

    if want_stats:
        osh, osp = tuple(out_shape), tuple(out_specs)
    else:
        osh, osp = out_shape[0], out_specs[0]
    return pl.pallas_call(
        kernel, grid=(N, HB), in_specs=in_specs, out_shape=osh, out_specs=osp,
        compiler_params=pltpu.CompilerParams(
            dimension_semantics=("parallel", "parallel"),
            vmem_limit_bytes=VMEM_CAP))


def conv3x3(x, w, b, *, act, alpha=None, ca_scale=None, bn_in=None,
            want_stats=False):
    """3x3 'same' conv (NHWC).  w: (3, 3*Cin, Cout) bf16, rows = dx*Cin + ci."""
    N, H, W, Cin = x.shape
    Cout = w.shape[2]
    TH = row_tile(H, W)
    in_tf = "ca" if ca_scale is not None else ("bn" if bn_in is not None else "none")
    call = _conv3x3_call(N, H, W, Cin, Cout, TH, act, in_tf, want_stats)
    x = x.astype(BF16)
    args = [x, x, x, w, b.reshape(1, Cout)]
    if act == "prelu":
        args.append(alpha)
    if in_tf == "ca":
        args.append(ca_scale.reshape(N, 1, Cin).astype(F32))
    elif in_tf == "bn":
        args.append(bn_in[0].reshape(1, Cin))
        args.append(bn_in[1].reshape(1, Cin))
    return call(*args)


def bn_affine(stats, gamma, beta, count):
    """stats: (N, HB, 2, C) partial [sum, sumsq] -> per-channel scale/shift."""
    s = jnp.sum(stats[:, :, 0, :], axis=(0, 1))
    ss = jnp.sum(stats[:, :, 1, :], axis=(0, 1))
    mean = s / count
    var = jnp.maximum(ss / count - mean * mean, 0.0)
    inv = jax.lax.rsqrt(var + EPS)
    sc = gamma * inv
    sh = beta - mean * sc
    return sc, sh


def conv_prelu_bn(x, prm, *, ca_scale=None, bn_in=None):
    """Conv3x3 + PReLU; returns pre-BN activation and its BN affine (folded
    forward into the consumer instead of a separate BN-apply HBM pass)."""
    N, H, W, _ = x.shape
    y, stats = conv3x3(x, prm["w"], prm["b"], act="prelu", alpha=prm["alpha"],
                       ca_scale=ca_scale, bn_in=bn_in, want_stats=True)
    sc, sh = bn_affine(stats, prm["gamma"], prm["beta"], float(N * H * W))
    return y, (sc, sh)


# ---------------------------------------------------------------------------
# SpatialAttention pieces (pool -> 7x7 conv -> stats -> fused tail).
# ---------------------------------------------------------------------------
@functools.lru_cache(maxsize=None)
def _pool_call(N, H, W, C, TH):
    """Channel mean/max of BN(y); lane-dense (N, 2, H, W) output."""
    def kernel(y_ref, sc_ref, sh_ref, o_ref):
        x = y_ref[0].astype(F32) * sc_ref[...] + sh_ref[...]   # (TH, W, C)
        pm = jnp.mean(x, axis=-1)                               # (TH, W)
        px = jnp.max(x, axis=-1)
        o_ref[0, 0:1] = pm.reshape(1, TH, W)
        o_ref[0, 1:2] = px.reshape(1, TH, W)

    return pl.pallas_call(
        kernel, grid=(N, H // TH),
        in_specs=[pl.BlockSpec((1, TH, W, C), lambda n, h: (n, h, 0, 0)),
                  pl.BlockSpec((1, C), lambda n, h: (0, 0)),
                  pl.BlockSpec((1, C), lambda n, h: (0, 0))],
        out_shape=jax.ShapeDtypeStruct((N, 2, H, W), F32),
        out_specs=pl.BlockSpec((1, 2, TH, W), lambda n, h: (n, 0, h, 0)),
        compiler_params=pltpu.CompilerParams(
            dimension_semantics=("parallel", "parallel")))


@functools.lru_cache(maxsize=None)
def _att_call(N, H, W):
    """7x7 conv + sigmoid over the (2, H+6, W+6) pooled map, lane-major."""
    Hp, Wp = H + 6, W + 6

    def kernel(p_ref, w_ref, o_ref):
        acc = jnp.zeros((H, W), F32)
        for c in range(2):
            p = p_ref[0, c]                                     # (Hp, Wp)
            for dy in range(7):
                for dx in range(7):
                    acc = acc + p[dy:dy + H, dx:dx + W] * w_ref[c * 49 + dy * 7 + dx]
        o_ref[0] = jax.nn.sigmoid(acc)

    return pl.pallas_call(
        kernel, grid=(N,),
        in_specs=[pl.BlockSpec((1, 2, Hp, Wp), lambda n: (n, 0, 0, 0)),
                  pl.BlockSpec(memory_space=pltpu.MemorySpace.SMEM)],
        out_shape=jax.ShapeDtypeStruct((N, H, W), F32),
        out_specs=pl.BlockSpec((1, H, W), lambda n: (n, 0, 0)),
        compiler_params=pltpu.CompilerParams(dimension_semantics=("parallel",)))


@functools.lru_cache(maxsize=None)
def _sastats_call(N, H, W, C, TH):
    """Partial sum/sumsq of att * BN(y) for the bn_sa statistics."""
    M = TH * W

    def kernel(y_ref, a_ref, sc_ref, sh_ref, st_ref):
        x = y_ref[0].astype(F32) * sc_ref[...] + sh_ref[...]
        xs = (a_ref[0][:, :, None] * x).reshape(M, C)
        s = jnp.sum(xs, axis=0, keepdims=True)
        ss = jnp.sum(xs * xs, axis=0, keepdims=True)
        st_ref[0, 0] = jnp.concatenate([s, ss], axis=0)

    return pl.pallas_call(
        kernel, grid=(N, H // TH),
        in_specs=[pl.BlockSpec((1, TH, W, C), lambda n, h: (n, h, 0, 0)),
                  pl.BlockSpec((1, TH, W), lambda n, h: (n, h, 0)),
                  pl.BlockSpec((1, C), lambda n, h: (0, 0)),
                  pl.BlockSpec((1, C), lambda n, h: (0, 0))],
        out_shape=jax.ShapeDtypeStruct((N, H // TH, 2, C), F32),
        out_specs=pl.BlockSpec((1, 1, 2, C), lambda n, h: (n, h, 0, 0)),
        compiler_params=pltpu.CompilerParams(
            dimension_semantics=("parallel", "parallel")))


@functools.lru_cache(maxsize=None)
def _tail_call(N, H, W, C, TH, with_trans):
    """xn = bn_sa(att * bn(y)) applied on the fly; Conv1x1 head and (optional)
    ConvTranspose2d(k=2, s=2) computed without materializing xn."""
    M = TH * W
    C2 = 2 * C

    in_specs = [pl.BlockSpec((1, TH, W, C), lambda n, h: (n, h, 0, 0)),
                pl.BlockSpec((1, TH, W), lambda n, h: (n, h, 0)),
                pl.BlockSpec((1, C), lambda n, h: (0, 0)),
                pl.BlockSpec((1, C), lambda n, h: (0, 0)),
                pl.BlockSpec((1, C), lambda n, h: (0, 0)),
                pl.BlockSpec((C, 2), lambda n, h: (0, 0)),
                pl.BlockSpec((1, 2), lambda n, h: (0, 0))]
    out_shape = [jax.ShapeDtypeStruct((N, H, W, 2), F32)]
    out_specs = [pl.BlockSpec((1, TH, W, 2), lambda n, h: (n, h, 0, 0))]
    if with_trans:
        in_specs += [pl.BlockSpec((2, C, C2), lambda n, h: (0, 0, 0)),
                     pl.BlockSpec((1, C2), lambda n, h: (0, 0))]
        out_shape.append(jax.ShapeDtypeStruct((N, H, 2, W, C2), BF16))
        out_specs.append(pl.BlockSpec((1, TH, 2, W, C2),
                                      lambda n, h: (n, h, 0, 0, 0)))

    def kernel(*refs):
        y_ref, a_ref, A_ref, B_ref, C0_ref, hw_ref, hb_ref = refs[:7]
        i = 7
        wt_ref = bt_ref = None
        if with_trans:
            wt_ref, bt_ref = refs[i], refs[i + 1]; i += 2
        lg_ref = refs[i]; i += 1
        tr_ref = refs[i] if with_trans else None

        xf = y_ref[0].astype(F32)                               # (TH, W, C)
        att = a_ref[0][:, :, None]                              # (TH, W, 1)
        xn = att * (xf * A_ref[...] + B_ref[...]) + C0_ref[...]
        xn2 = xn.reshape(M, C)
        lg = jnp.dot(xn2, hw_ref[...], preferred_element_type=F32) + hb_ref[...]
        lg_ref[0] = lg.reshape(TH, W, 2)
        if with_trans:
            xb = xn2.astype(BF16)
            for dy in range(2):
                r = (jnp.dot(xb, wt_ref[dy], preferred_element_type=F32)
                     + bt_ref[...])
                tr_ref[0, :, dy:dy + 1] = r.reshape(TH, 1, W, C2).astype(BF16)

    osh = tuple(out_shape) if with_trans else out_shape[0]
    osp = tuple(out_specs) if with_trans else out_specs[0]
    return pl.pallas_call(
        kernel, grid=(N, H // TH), in_specs=in_specs,
        out_shape=osh, out_specs=osp,
        compiler_params=pltpu.CompilerParams(
            dimension_semantics=("parallel", "parallel"),
            vmem_limit_bytes=VMEM_CAP))


def branch_tail(y, bn3, sa_w, bn_sa, head, trans=None):
    """x = bn_sa(sa(bn(y)) * bn(y)); returns (Conv1x1 logits NCHW, trans_conv(x))."""
    N, H, W, C = y.shape
    TH = row_tile(H, W)
    sc3, sh3 = bn3
    pooled = _pool_call(N, H, W, C, TH)(y, sc3.reshape(1, C), sh3.reshape(1, C))
    pp = jnp.pad(pooled, ((0, 0), (0, 0), (3, 3), (3, 3)))
    att = _att_call(N, H, W)(pp, sa_w)
    st = _sastats_call(N, H, W, C, TH)(y, att, sc3.reshape(1, C), sh3.reshape(1, C))
    sa_sc, sa_sh = bn_affine(st, bn_sa["gamma"], bn_sa["beta"], float(N * H * W))
    A = (sc3 * sa_sc).reshape(1, C)
    B = (sh3 * sa_sc).reshape(1, C)
    C0 = sa_sh.reshape(1, C)
    hw, hb = head["w"], head["b"].reshape(1, 2)
    if trans is None:
        lg = _tail_call(N, H, W, C, TH, False)(y, att, A, B, C0, hw, hb)
        return jnp.transpose(lg, (0, 3, 1, 2)), None
    wt, bt = trans["w"], trans["b"]
    C2 = wt.shape[2]
    bt2 = jnp.concatenate([bt, bt]).reshape(1, C2)
    lg, tr = _tail_call(N, H, W, C, TH, True)(y, att, A, B, C0, hw, hb, wt, bt2)
    up = tr.reshape(N, 2 * H, 2 * W, C2 // 2)                   # free reshape
    return jnp.transpose(lg, (0, 3, 1, 2)), up


# ---------------------------------------------------------------------------
# Channel attention: row-block-accumulated spatial pooling + tiny shared MLP.
# ---------------------------------------------------------------------------
@functools.lru_cache(maxsize=None)
def _capool_call(N, H, W, C, TH):
    M = TH * W

    def kernel(x_ref, o_ref):
        x = x_ref[0].astype(F32).reshape(M, C)
        s = jnp.sum(x, axis=0, keepdims=True)
        m = jnp.max(x, axis=0, keepdims=True)

        @pl.when(pl.program_id(1) == 0)
        def _():
            o_ref[0] = jnp.concatenate([s, m], axis=0)

        @pl.when(pl.program_id(1) > 0)
        def _():
            o_ref[0, 0:1] = o_ref[0, 0:1] + s
            o_ref[0, 1:2] = jnp.maximum(o_ref[0, 1:2], m)

    return pl.pallas_call(
        kernel, grid=(N, H // TH),
        in_specs=[pl.BlockSpec((1, TH, W, C), lambda n, h: (n, h, 0, 0))],
        out_shape=jax.ShapeDtypeStruct((N, 2, C), F32),
        out_specs=pl.BlockSpec((1, 2, C), lambda n, h: (n, 0, 0)),
        compiler_params=pltpu.CompilerParams(
            dimension_semantics=("parallel", "arbitrary")))


@functools.lru_cache(maxsize=None)
def _camlp_call(N, C, Cr):
    def kernel(avg_ref, mx_ref, w1_ref, w2_ref, o_ref):
        w1, w2 = w1_ref[...], w2_ref[...]

        def mlp(v):
            hdn = jnp.maximum(jnp.dot(v, w1, preferred_element_type=F32), 0.0)
            return jnp.dot(hdn, w2, preferred_element_type=F32)

        o_ref[...] = jax.nn.sigmoid(mlp(avg_ref[...]) + mlp(mx_ref[...]))

    return pl.pallas_call(kernel, out_shape=jax.ShapeDtypeStruct((N, C), F32))


def channel_attention_scale(x, w1, w2):
    N, H, W, C = x.shape
    TH = row_tile(H, W)
    red = _capool_call(N, H, W, C, TH)(x.astype(BF16))
    avg = red[:, 0, :] / float(H * W)
    mx = red[:, 1, :]
    return _camlp_call(N, C, w1.shape[1])(avg, mx, w1, w2)      # (N, C)


# ---------------------------------------------------------------------------
# Glue (pure JAX)
# ---------------------------------------------------------------------------
def maxpool2(x):
    N, H, W, C = x.shape
    return jnp.max(x.reshape(N, H // 2, 2, W // 2, 2, C), axis=(2, 4))


def _bilinear_down(g, f):
    # F.interpolate(scale=1/f, bilinear, align_corners=False) for even integer f.
    N, H, W = g.shape
    i = jnp.arange(H // f) * f + f // 2
    r = 0.5 * (g[:, i - 1, :] + g[:, i, :])
    j = jnp.arange(W // f) * f + f // 2
    return 0.5 * (r[:, :, j - 1] + r[:, :, j])


# ---------------------------------------------------------------------------
# Parameters (deterministic He init; shapes follow DSIFN.__init__)
# ---------------------------------------------------------------------------
VGG_CHS = [(3, 64), (64, 64), (64, 128), (128, 128),
           (128, 256), (256, 256), (256, 256),
           (256, 512), (512, 512), (512, 512),
           (512, 512), (512, 512), (512, 512)]


def init_params(key):
    keys = iter(jax.random.split(key, 256))

    def conv_w(cin, cout):
        w = jax.random.normal(next(keys), (3, 3, cin, cout), F32) * (2.0 / (9 * cin)) ** 0.5
        return w.reshape(3, 3 * cin, cout).astype(BF16)

    def dense_w(cin, cout):
        return jax.random.normal(next(keys), (cin, cout), F32) * (2.0 / cin) ** 0.5

    def cbn(cin, cout):
        return dict(w=conv_w(cin, cout), b=jnp.zeros((cout,), F32),
                    alpha=jnp.full((1,), 0.25, F32),
                    gamma=jnp.ones((cout,), F32), beta=jnp.zeros((cout,), F32))

    p = {}
    p["vgg"] = [dict(w=conv_w(ci, co), b=jnp.zeros((co,), F32)) for ci, co in VGG_CHS]

    p["o1_conv1"], p["o1_conv2"] = cbn(1024, 512), cbn(512, 512)
    p["o2_conv1"], p["o2_conv2"], p["o2_conv3"] = cbn(1536, 512), cbn(512, 256), cbn(256, 256)
    p["o3_conv1"], p["o3_conv2"], p["o3_conv3"] = cbn(768, 256), cbn(256, 128), cbn(128, 128)
    p["o4_conv1"], p["o4_conv2"], p["o4_conv3"] = cbn(384, 128), cbn(128, 64), cbn(64, 64)
    p["o5_conv1"], p["o5_conv2"], p["o5_conv3"] = cbn(192, 64), cbn(64, 32), cbn(32, 16)

    for i, c in zip(range(1, 6), (512, 256, 128, 64, 16)):
        p[f"bn_sa{i}"] = dict(gamma=jnp.ones((c,), F32), beta=jnp.zeros((c,), F32))
        p[f"sa{i}_w"] = (jax.random.normal(next(keys), (98,), F32)
                         * (2.0 / 98.0) ** 0.5)                   # SpatialAttention 7x7

    for i, c in zip(range(2, 6), (1536, 768, 384, 192)):
        p[f"ca{i}"] = dict(w1=dense_w(c, c // 8), w2=dense_w(c // 8, c))

    for name, cin in (("o1_conv3", 512), ("o2_conv4", 256), ("o3_conv4", 128),
                      ("o4_conv4", 64), ("o5_conv4", 16)):
        p[name] = dict(w=dense_w(cin, 2), b=jnp.zeros((2,), F32))

    for i, c in zip(range(1, 5), (512, 256, 128, 64)):
        w = jax.random.normal(next(keys), (2, c, 2 * c), F32) * (2.0 / c) ** 0.5
        p[f"trans_conv{i}"] = dict(w=w.astype(BF16), b=jnp.zeros((c,), F32))
    return p


# ---------------------------------------------------------------------------
# Forward
# ---------------------------------------------------------------------------
def vgg_features(x, vgg_params):
    """torchvision vgg16.features[:30], outputs after ReLUs 3/8/15/22/29."""
    feats = []
    pick_after = {1, 3, 6, 9, 12}
    pool_after = {1, 3, 6, 9}
    for ci, prm in enumerate(vgg_params):
        x = conv3x3(x, prm["w"], prm["b"], act="relu")
        if ci in pick_after:
            feats.append(x)
        if ci in pool_after:
            x = maxpool2(x)
    return feats


def dsifn_forward(params, t1_nchw, t2_nchw, gt):
    t1 = jnp.transpose(t1_nchw, (0, 2, 3, 1)).astype(BF16)
    t2 = jnp.transpose(t2_nchw, (0, 2, 3, 1)).astype(BF16)
    f1 = vgg_features(t1, params["vgg"])
    f2 = vgg_features(t2, params["vgg"])

    def run_branch(xcat, idx, conv_names, head_name, use_ca, trans_name):
        ca_scale = None
        if use_ca:
            ca = params[f"ca{idx}"]
            ca_scale = channel_attention_scale(xcat, ca["w1"], ca["w2"])
        y, bn = conv_prelu_bn(xcat, params[conv_names[0]], ca_scale=ca_scale)
        for name in conv_names[1:]:
            y, bn = conv_prelu_bn(y, params[name], bn_in=bn)
        trans = params[trans_name] if trans_name else None
        return branch_tail(y, bn, params[f"sa{idx}_w"], params[f"bn_sa{idx}"],
                           params[head_name], trans)

    # branch 1 (1/16 resolution)
    x = jnp.concatenate([f1[4], f2[4]], axis=-1)
    out1, x = run_branch(x, 1, ["o1_conv1", "o1_conv2"], "o1_conv3", False,
                         "trans_conv1")
    # branch 2 (1/8)
    x = jnp.concatenate([x, f1[3], f2[3]], axis=-1)
    out2, x = run_branch(x, 2, ["o2_conv1", "o2_conv2", "o2_conv3"], "o2_conv4",
                         True, "trans_conv2")
    # branch 3 (1/4)
    x = jnp.concatenate([x, f1[2], f2[2]], axis=-1)
    out3, x = run_branch(x, 3, ["o3_conv1", "o3_conv2", "o3_conv3"], "o3_conv4",
                         True, "trans_conv3")
    # branch 4 (1/2)
    x = jnp.concatenate([x, f1[1], f2[1]], axis=-1)
    out4, x = run_branch(x, 4, ["o4_conv1", "o4_conv2", "o4_conv3"], "o4_conv4",
                         True, "trans_conv4")
    # branch 5 (full resolution)
    x = jnp.concatenate([x, f1[0], f2[0]], axis=-1)
    out5, _ = run_branch(x, 5, ["o5_conv1", "o5_conv2", "o5_conv3"], "o5_conv4",
                         True, None)

    # ground-truth pyramid (bilinear, align_corners=False)
    gt = gt.astype(F32)
    gt5 = gt.astype(jnp.int32)
    gt4 = _bilinear_down(gt, 2).astype(jnp.int32)
    gt3 = _bilinear_down(gt, 4).astype(jnp.int32)
    gt2 = _bilinear_down(gt, 8).astype(jnp.int32)
    gt1 = _bilinear_down(gt, 16).astype(jnp.int32)

    return (out5, out4, out3, out2, out1, gt5, gt4, gt3, gt2, gt1)


# ---------------------------------------------------------------------------
if __name__ == "__main__":
    root = jax.random.PRNGKey(0)
    pkey, dkey = jax.random.split(root)
    params = init_params(pkey)

    N, H, W = 1, 32, 32
    k1, k2, k3 = jax.random.split(dkey, 3)
    t1 = jax.random.normal(k1, (N, 3, H, W), jnp.float32)   # NCHW like PyTorch
    t2 = jax.random.normal(k2, (N, 3, H, W), jnp.float32)
    gt = (jax.random.uniform(k3, (N, H, W)) > 0.5).astype(jnp.float32)

    outs = dsifn_forward(params, t1, t2, gt)
    outs = jax.block_until_ready(outs)

    expected = [(N, 2, H, W), (N, 2, H // 2, W // 2), (N, 2, H // 4, W // 4),
                (N, 2, H // 8, W // 8), (N, 2, H // 16, W // 16),
                (N, H, W), (N, H // 2, W // 2), (N, H // 4, W // 4),
                (N, H // 8, W // 8), (N, H // 16, W // 16)]
    assert all(tuple(o.shape) == e for o, e in zip(outs, expected))
    assert all(bool(jnp.all(jnp.isfinite(o.astype(jnp.float32)))) for o in outs[:5])
    print("KERNEL_OK")
</pallas_src>

<mosaic_0001>
module attributes {stable_mosaic.version = 11 : i64} {
  func.func @kernel(%arg0: i32, %arg1: i32, %arg2: memref<1x8x32x3xbf16, #tpu.memory_space<vmem>>, %arg3: memref<1x1x32x3xbf16, #tpu.memory_space<vmem>>, %arg4: memref<1x1x32x3xbf16, #tpu.memory_space<vmem>>, %arg5: memref<3x9x64xbf16, #tpu.memory_space<vmem>>, %arg6: memref<1x64xf32, #tpu.memory_space<vmem>>, %arg7: memref<1x8x32x64xbf16, #tpu.memory_space<vmem>>) attributes {dimension_semantics = [#tpu.dimension_semantics<parallel>, #tpu.dimension_semantics<parallel>], iteration_bounds = array<i64: 1, 4>, scalar_prefetch = 0 : i64, scratch_operands = 0 : i64, tpu.core_type = #tpu.core_type<tc>, window_params = [{transform_indices = @transform_0, window_bounds = array<i64: 1, 8, 32, 3>}, {transform_indices = @transform_1, window_bounds = array<i64: 1, 1, 32, 3>}, {transform_indices = @transform_2, window_bounds = array<i64: 1, 1, 32, 3>}, {pipeline_mode = #tpu.pipeline_mode<synchronous>, transform_indices = @transform_3, window_bounds = array<i64: 3, 9, 64>}, {pipeline_mode = #tpu.pipeline_mode<synchronous>, transform_indices = @transform_4, window_bounds = array<i64: 1, 64>}, {transform_indices = @transform_5, window_bounds = array<i64: 1, 8, 32, 64>}]} {
    %c0_i32 = arith.constant 0 : i32
    %0 = arith.cmpi sgt, %arg1, %c0_i32 : i32
    %1 = arith.extui %0 : i1 to i32
    %2 = arith.sitofp %1 : i32 to f32
    %c3_i32 = arith.constant 3 : i32
    %3 = arith.cmpi slt, %arg1, %c3_i32 : i32
    %4 = arith.extui %3 : i1 to i32
    %5 = arith.sitofp %4 : i32 to f32
    %c0 = arith.constant 0 : index
    %c0_0 = arith.constant 0 : index
    %c0_1 = arith.constant 0 : index
    %c0_2 = arith.constant 0 : index
    %6 = vector.load %arg3[%c0, %c0_0, %c0_1, %c0_2] : memref<1x1x32x3xbf16, #tpu.memory_space<vmem>>, vector<1x1x32x3xbf16>
    %7 = vector.shape_cast %6 : vector<1x1x32x3xbf16> to vector<1x32x3xbf16>
    %8 = arith.extf %7 : vector<1x32x3xbf16> to vector<1x32x3xf32>
    %9 = vector.broadcast %2 : f32 to vector<1x32x3xf32>
    %10 = arith.mulf %8, %9 : vector<1x32x3xf32>
    %11 = arith.truncf %10 : vector<1x32x3xf32> to vector<1x32x3xbf16>
    %c0_3 = arith.constant 0 : index
    %c0_4 = arith.constant 0 : index
    %c0_5 = arith.constant 0 : index
    %c0_6 = arith.constant 0 : index
    %12 = vector.load %arg4[%c0_3, %c0_4, %c0_5, %c0_6] : memref<1x1x32x3xbf16, #tpu.memory_space<vmem>>, vector<1x1x32x3xbf16>
    %13 = vector.shape_cast %12 : vector<1x1x32x3xbf16> to vector<1x32x3xbf16>
    %14 = arith.extf %13 : vector<1x32x3xbf16> to vector<1x32x3xf32>
    %15 = vector.broadcast %5 : f32 to vector<1x32x3xf32>
    %16 = arith.mulf %14, %15 : vector<1x32x3xf32>
    %17 = arith.truncf %16 : vector<1x32x3xf32> to vector<1x32x3xbf16>
    %c0_7 = arith.constant 0 : index
    %c0_8 = arith.constant 0 : index
    %c0_9 = arith.constant 0 : index
    %c0_10 = arith.constant 0 : index
    %18 = vector.load %arg2[%c0_7, %c0_8, %c0_9, %c0_10] : memref<1x8x32x3xbf16, #tpu.memory_space<vmem>>, vector<1x8x32x3xbf16>
    %19 = vector.shape_cast %18 : vector<1x8x32x3xbf16> to vector<8x32x3xbf16>
    %20 = tpu.concatenate %11, %19, %17 in 0 : vector<1x32x3xbf16>, vector<8x32x3xbf16>, vector<1x32x3xbf16> -> vector<10x32x3xbf16>
    %cst = arith.constant 0.000000e+00 : bf16
    %21 = vector.broadcast %cst : bf16 to vector<10x1x3xbf16>
    %22 = tpu.concatenate %21, %20, %21 in 1 : vector<10x1x3xbf16>, vector<10x32x3xbf16>, vector<10x1x3xbf16> -> vector<10x34x3xbf16>
    %cst_11 = arith.constant 0.000000e+00 : f32
    %23 = vector.broadcast %cst_11 : f32 to vector<256x64xf32>
    %24 = vector.extract_strided_slice %22 {offsets = [0, 0, 0], sizes = [8, 34, 3], strides = [1, 1, 1]} : vector<10x34x3xbf16> to vector<8x34x3xbf16>
    %25 = vector.extract_strided_slice %24 {offsets = [0, 0, 0], sizes = [8, 32, 3], strides = [1, 1, 1]} : vector<8x34x3xbf16> to vector<8x32x3xbf16>
    %26 = vector.extract_strided_slice %24 {offsets = [0, 1, 0], sizes = [8, 32, 3], strides = [1, 1, 1]} : vector<8x34x3xbf16> to vector<8x32x3xbf16>
    %27 = vector.extract_strided_slice %24 {offsets = [0, 2, 0], sizes = [8, 32, 3], strides = [1, 1, 1]} : vector<8x34x3xbf16> to vector<8x32x3xbf16>
    %28 = tpu.concatenate %25, %26, %27 in 2 : vector<8x32x3xbf16>, vector<8x32x3xbf16>, vector<8x32x3xbf16> -> vector<8x32x9xbf16>
    %29 = vector.shape_cast %28 : vector<8x32x9xbf16> to vector<256x9xbf16>
    %c0_12 = arith.constant 0 : index
    %c0_13 = arith.constant 0 : index
    %c0_14 = arith.constant 0 : index
    %30 = vector.load %arg5[%c0_12, %c0_13, %c0_14] : memref<3x9x64xbf16, #tpu.memory_space<vmem>>, vector<1x9x64xbf16>
    %31 = vector.shape_cast %30 : vector<1x9x64xbf16> to vector<9x64xbf16>
    %cst_15 = arith.constant dense<0.000000e+00> : vector<256x64xf32>
    %32 = tpu.matmul %29, %31, %cst_15 {dimension_numbers = #tpu.dot_dimension_numbers<[1], [0], [0], [1], [0, 0, 1, 1], [], []>} : vector<256x9xbf16>, vector<9x64xbf16>, vector<256x64xf32> -> vector<256x64xf32>
    %33 = arith.addf %23, %32 : vector<256x64xf32>
    %34 = vector.extract_strided_slice %22 {offsets = [1, 0, 0], sizes = [8, 34, 3], strides = [1, 1, 1]} : vector<10x34x3xbf16> to vector<8x34x3xbf16>
    %35 = vector.extract_strided_slice %34 {offsets = [0, 0, 0], sizes = [8, 32, 3], strides = [1, 1, 1]} : vector<8x34x3xbf16> to vector<8x32x3xbf16>
    %36 = vector.extract_strided_slice %34 {offsets = [0, 1, 0], sizes = [8, 32, 3], strides = [1, 1, 1]} : vector<8x34x3xbf16> to vector<8x32x3xbf16>
    %37 = vector.extract_strided_slice %34 {offsets = [0, 2, 0], sizes = [8, 32, 3], strides = [1, 1, 1]} : vector<8x34x3xbf16> to vector<8x32x3xbf16>
    %38 = tpu.concatenate %35, %36, %37 in 2 : vector<8x32x3xbf16>, vector<8x32x3xbf16>, vector<8x32x3xbf16> -> vector<8x32x9xbf16>
    %39 = vector.shape_cast %38 : vector<8x32x9xbf16> to vector<256x9xbf16>
    %c1 = arith.constant 1 : index
    %c0_16 = arith.constant 0 : index
    %c0_17 = arith.constant 0 : index
    %40 = vector.load %arg5[%c1, %c0_16, %c0_17] : memref<3x9x64xbf16, #tpu.memory_space<vmem>>, vector<1x9x64xbf16>
    %41 = vector.shape_cast %40 : vector<1x9x64xbf16> to vector<9x64xbf16>
    %cst_18 = arith.constant dense<0.000000e+00> : vector<256x64xf32>
    %42 = tpu.matmul %39, %41, %cst_18 {dimension_numbers = #tpu.dot_dimension_numbers<[1], [0], [0], [1], [0, 0, 1, 1], [], []>} : vector<256x9xbf16>, vector<9x64xbf16>, vector<256x64xf32> -> vector<256x64xf32>
    %43 = arith.addf %33, %42 : vector<256x64xf32>
    %44 = vector.extract_strided_slice %22 {offsets = [2, 0, 0], sizes = [8, 34, 3], strides = [1, 1, 1]} : vector<10x34x3xbf16> to vector<8x34x3xbf16>
    %45 = vector.extract_strided_slice %44 {offsets = [0, 0, 0], sizes = [8, 32, 3], strides = [1, 1, 1]} : vector<8x34x3xbf16> to vector<8x32x3xbf16>
    %46 = vector.extract_strided_slice %44 {offsets = [0, 1, 0], sizes = [8, 32, 3], strides = [1, 1, 1]} : vector<8x34x3xbf16> to vector<8x32x3xbf16>
    %47 = vector.extract_strided_slice %44 {offsets = [0, 2, 0], sizes = [8, 32, 3], strides = [1, 1, 1]} : vector<8x34x3xbf16> to vector<8x32x3xbf16>
    %48 = tpu.concatenate %45, %46, %47 in 2 : vector<8x32x3xbf16>, vector<8x32x3xbf16>, vector<8x32x3xbf16> -> vector<8x32x9xbf16>
    %49 = vector.shape_cast %48 : vector<8x32x9xbf16> to vector<256x9xbf16>
    %c2 = arith.constant 2 : index
    %c0_19 = arith.constant 0 : index
    %c0_20 = arith.constant 0 : index
    %50 = vector.load %arg5[%c2, %c0_19, %c0_20] : memref<3x9x64xbf16, #tpu.memory_space<vmem>>, vector<1x9x64xbf16>
    %51 = vector.shape_cast %50 : vector<1x9x64xbf16> to vector<9x64xbf16>
    %cst_21 = arith.constant dense<0.000000e+00> : vector<256x64xf32>
    %52 = tpu.matmul %49, %51, %cst_21 {dimension_numbers = #tpu.dot_dimension_numbers<[1], [0], [0], [1], [0, 0, 1, 1], [], []>} : vector<256x9xbf16>, vector<9x64xbf16>, vector<256x64xf32> -> vector<256x64xf32>
    %53 = arith.addf %43, %52 : vector<256x64xf32>
    %c0_22 = arith.constant 0 : index
    %c0_23 = arith.constant 0 : index
    %54 = vector.load %arg6[%c0_22, %c0_23] : memref<1x64xf32, #tpu.memory_space<vmem>>, vector<1x64xf32>
    %55 = vector.broadcast %54 : vector<1x64xf32> to vector<256x64xf32>
    %56 = arith.addf %53, %55 : vector<256x64xf32>
    %cst_24 = arith.constant 0.000000e+00 : f32
    %57 = vector.broadcast %cst_24 : f32 to vector<256x64xf32>
    %58 = arith.maximumf %56, %57 : vector<256x64xf32>
    %59 = vector.shape_cast %58 : vector<256x64xf32> to vector<8x32x64xf32>
    %60 = arith.truncf %59 : vector<8x32x64xf32> to vector<8x32x64xbf16>
    %c0_25 = arith.constant 0 : index
    %c0_26 = arith.constant 0 : index
    %c0_27 = arith.constant 0 : index
    %c0_28 = arith.constant 0 : index
    %61 = vector.load %arg7[%c0_25, %c0_26, %c0_27, %c0_28] : memref<1x8x32x64xbf16, #tpu.memory_space<vmem>>, vector<1x8x32x64xbf16>
    %62 = vector.shape_cast %61 : vector<1x8x32x64xbf16> to vector<8x32x64xbf16>
    %63 = vector.shape_cast %60 : vector<8x32x64xbf16> to vector<1x8x32x64xbf16>
    tpu.vector_store %arg7[%c0_25, %c0_26, %c0_27, %c0_28], %63 {strides = array<i32>} : memref<1x8x32x64xbf16, #tpu.memory_space<vmem>>, vector<1x8x32x64xbf16>,
    return
  }
  func.func @transform_0(%arg0: i32, %arg1: i32) -> (i32, i32, i32, i32) {
    %c0_i32 = arith.constant 0 : i32
    %c0_i32_0 = arith.constant 0 : i32
    %c0_i32_1 = arith.constant 0 : i32
    return %arg0, %arg1, %c0_i32, %c0_i32_0 : i32, i32, i32, i32
  }
  func.func @transform_1(%arg0: i32, %arg1: i32) -> (i32, i32, i32, i32) {
    %c8_i32 = arith.constant 8 : i32
    %0 = arith.muli %arg1, %c8_i32 : i32
    %c1_i32 = arith.constant 1 : i32
    %1 = arith.subi %0, %c1_i32 : i32
    %c0_i32 = arith.constant 0 : i32
    %2 = arith.maxsi %1, %c0_i32 : i32
    %c0_i32_0 = arith.constant 0 : i32
    %c0_i32_1 = arith.constant 0 : i32
    %c0_i32_2 = arith.constant 0 : i32
    return %arg0, %2, %c0_i32_0, %c0_i32_1 : i32, i32, i32, i32
  }
  func.func @transform_2(%arg0: i32, %arg1: i32) -> (i32, i32, i32, i32) {
    %c1_i32 = arith.constant 1 : i32
    %0 = arith.addi %arg1, %c1_i32 : i32
    %c8_i32 = arith.constant 8 : i32
    %1 = arith.muli %0, %c8_i32 : i32
    %c31_i32 = arith.constant 31 : i32
    %2 = arith.minsi %1, %c31_i32 : i32
    %c0_i32 = arith.constant 0 : i32
    %c0_i32_0 = arith.constant 0 : i32
    %c0_i32_1 = arith.constant 0 : i32
    return %arg0, %2, %c0_i32, %c0_i32_0 : i32, i32, i32, i32
  }
  func.func @transform_3(%arg0: i32, %arg1: i32) -> (i32, i32, i32) {
    %c0_i32 = arith.constant 0 : i32
    %c0_i32_0 = arith.constant 0 : i32
    %c0_i32_1 = arith.constant 0 : i32
    %c0_i32_2 = arith.constant 0 : i32
    return %c0_i32, %c0_i32_0, %c0_i32_1 : i32, i32, i32
  }
  func.func @transform_4(%arg0: i32, %arg1: i32) -> (i32, i32) {
    %c0_i32 = arith.constant 0 : i32
    %c0_i32_0 = arith.constant 0 : i32
    %c0_i32_1 = arith.constant 0 : i32
    return %c0_i32, %c0_i32_0 : i32, i32
  }
  func.func @transform_5(%arg0: i32, %arg1: i32) -> (i32, i32, i32, i32) {
    %c0_i32 = arith.constant 0 : i32
    %c0_i32_0 = arith.constant 0 : i32
    %c0_i32_1 = arith.constant 0 : i32
    return %arg0, %arg1, %c0_i32, %c0_i32_0 : i32, i32, i32, i32
  }
}

</mosaic_0001>

<llo_original>
// kernel: tpu_custom_call.1
$region0: #{tpu_custom_call.1}
  #allocation0 [shape = 'u32[]', space=smem, size = 0x4, offset = 0x4, fixed_abs, tag = 'smem constant byte address 0x4 - core index']
  #allocation1 [shape = 'u32[144,128]{1,0:T(1,128)}', space=vmem, size = 0x12000, scoped, tag = 'internal scratch']
  %s0 = inlined_call_operand.vmem [shape: bf16[1,32,32,3], index: 0, kind: input, shape index: {}]
  %s1 = inlined_call_operand.vmem [shape: bf16[1,32,32,3], index: 1, kind: input, shape index: {}]
  %s2 = inlined_call_operand.vmem [shape: bf16[1,32,32,3], index: 2, kind: input, shape index: {}]
  %s3 = inlined_call_operand.vmem [shape: bf16[3,9,64], index: 3, kind: input, shape index: {}]
  %s4 = inlined_call_operand.vmem [shape: f32[1,64], index: 4, kind: input, shape index: {}]
  %s5 = inlined_call_operand.hbm [shape: bf16[1,32,32,64], index: 5, kind: output, shape index: {}]
  %s6 = sld [smem:[#allocation0]]
  $region53: #{tpu_custom_call.1} parent=0
    _
  %s8 = ssub.s32 1, %s6
  %s9 = scalar_select 0, %s8, %s6
  $region1: #{tpu_custom_call.1} parent=0
    #allocation2 [shape = 'u8[131072]{0}', space=vmem, size = 0x20000, scoped, tag = 'output window, operand 0']
    #allocation3 [shape = 's32[2]{0}', space=sflag, size = 0x8, scoped, tag = 'scoped memory for tpu_custom_call.1']
    %10 = vsyncpa [#allocation3], 0
    %s11 = scalar_lea.sflag [#allocation3], 1
    %12 = vsyncpa %s11, 0
    loop: start=0, step=1, limit=6
    $region2: #{tpu_custom_call.1} parent=1 // loop_pre_header
      _
    $region3: #{tpu_custom_call.1} parent=1 // loop_header
      %s14 = sphi 0, %s18
      %p15 = scmp.ge.s32.totalorder %s14, 6
      %s21 = sphi 0, %s33
      %s22 = sphi 0, %s29
      %s23 = sphi 0, %s21
      %s24 = sphi 0, %s22
      %s25 = sphi 0, %s23
      %s26 = sphi 0, %s24
      %s38 = sphi 0, %s40
      %s41 = sphi 0, %s38
      %s42 = sphi 0, %s41
      %s58 = sphi 0, %s42
      %s74 = sphi 0, %s76
      %s77 = sphi 0, %s74
      %s78 = sphi 0, %s77
      %s94 = sphi 0, %s78
      %s110 = sphi 0, %s112
      %s113 = sphi 0, %s110
      %s114 = sphi 0, %s113
      %s130 = sphi 0, %s114
      %s134 = sphi 0, %s134
      %s136 = sphi 0, %s134
      %s137 = sphi 0, %s136
      %s151 = sphi 0, %s137
      %s155 = sphi 0, %s155
      %s157 = sphi 0, %s155
      %s158 = sphi 0, %s157
      %s172 = sphi 0, %s158
      %s180 = sphi 0, %s182
      %s183 = sphi 0, %s180
      %s184 = sphi 0, %s183
      %s200 = sphi 0, %s184
    $region4: #{tpu_custom_call.1} parent=1 // loop_header_branch
      %17 = sbr.rel (%p15) target = $region8
    $region5: #{tpu_custom_call.1} parent=1 // loop_body
      %s19 = ssub.s32 %s14, 1
      %s20 = ssub.s32 %s14, 2
      %s27 = sadd.s32 1, %s22
      %p28 = scmp.ge.s32.totalorder %s27, 4
      %s29 = scalar_select %p28, 0, %s27
      %s30 = sadd.s32 1, %s21
      %s31 = scalar_select %p28, %s30, %s21
      %p32 = scmp.ge.s32.totalorder %s31, 1
      %s33 = scalar_select %p32, 0, %s31
      %s34 = ssub.s32 %s21, %s33
      %s35 = ssub.s32 %s22, %s29
      %s36 = sor.u32 %s34, %s35
      %p37 = scmp.eq.s32.totalorder %s36, 0
      %s39 = sadd.s32 %s38, 1
      %s40 = scalar_select %p37, %s38, %s39
      %p43 = pneg %p37
      %p44 = scmp.eq.s32.totalorder %s14, 3
      %p45 = por %p43, %p44
      %p46 = scmp.ne.s32.totalorder %s38, %s41
      %p47 = scmp.eq.s32.totalorder %s14, 0
      %p48 = por %p46, %p47
      %p49 = scmp.ne.s32.totalorder %s38, %s41
      %p50 = scmp.eq.s32.totalorder %s19, 3
      %p51 = por %p49, %p50
      %p52 = scmp.ne.s32.totalorder %s41, %s42
      %p53 = scmp.eq.s32.totalorder %s19, 0
      %p54 = por %p52, %p53
      %p55 = scmp.ne.s32.totalorder %s41, %s42
      %p56 = scmp.eq.s32.totalorder %s20, 3
      %p57 = por %p55, %p56
      %p59 = scmp.ne.s32.totalorder %s42, %s58
      %p60 = scmp.eq.s32.totalorder %s20, 0
      %p61 = por %p59, %p60
      %s62 = smul.u32 %s22, 8
      %s63 = ssub.s32 %s62, 1
      %p64 = scmp.gt.s32.totalorder %s63, 0
      %s65 = scalar_select %p64, %s63, 0
      %s66 = smul.u32 %s29, 8
      %s67 = ssub.s32 %s66, 1
      %p68 = scmp.gt.s32.totalorder %s67, 0
      %s69 = scalar_select %p68, %s67, 0
      %s70 = ssub.s32 %s21, %s33
      %s71 = ssub.s32 %s65, %s69
      %s72 = sor.u32 %s70, %s71
      %p73 = scmp.eq.s32.totalorder %s72, 0
      %s75 = sadd.s32 %s74, 1
      %s76 = scalar_select %p73, %s74, %s75
      %p79 = pneg %p73
      %p80 = scmp.eq.s32.totalorder %s14, 3
      %p81 = por %p79, %p80
      %p82 = scmp.ne.s32.totalorder %s74, %s77
      %p83 = scmp.eq.s32.totalorder %s14, 0
      %p84 = por %p82, %p83
      %p85 = scmp.ne.s32.totalorder %s74, %s77
      %p86 = scmp.eq.s32.totalorder %s19, 3
      %p87 = por %p85, %p86
      %p88 = scmp.ne.s32.totalorder %s77, %s78
      %p89 = scmp.eq.s32.totalorder %s19, 0
      %p90 = por %p88, %p89
      %p91 = scmp.ne.s32.totalorder %s77, %s78
      %p92 = scmp.eq.s32.totalorder %s20, 3
      %p93 = por %p91, %p92
      %p95 = scmp.ne.s32.totalorder %s78, %s94
      %p96 = scmp.eq.s32.totalorder %s20, 0
      %p97 = por %p95, %p96
      %s98 = sadd.s32 %s22, 1
      %s99 = smul.u32 %s98, 8
      %p100 = scmp.lt.s32.totalorder %s99, 31
      %s101 = scalar_select %p100, %s99, 31
      %s102 = sadd.s32 %s29, 1
      %s103 = smul.u32 %s102, 8
      %p104 = scmp.lt.s32.totalorder %s103, 31
      %s105 = scalar_select %p104, %s103, 31
      %s106 = ssub.s32 %s21, %s33
      %s107 = ssub.s32 %s101, %s105
      %s108 = sor.u32 %s106, %s107
      %p109 = scmp.eq.s32.totalorder %s108, 0
      %s111 = sadd.s32 %s110, 1
      %s112 = scalar_select %p109, %s110, %s111
      %p115 = pneg %p109
      %p116 = scmp.eq.s32.totalorder %s14, 3
      %p117 = por %p115, %p116
      %p118 = scmp.ne.s32.totalorder %s110, %s113
      %p119 = scmp.eq.s32.totalorder %s14, 0
      %p120 = por %p118, %p119
      %p121 = scmp.ne.s32.totalorder %s110, %s113
      %p122 = scmp.eq.s32.totalorder %s19, 3
      %p123 = por %p121, %p122
      %p124 = scmp.ne.s32.totalorder %s113, %s114
      %p125 = scmp.eq.s32.totalorder %s19, 0
      %p126 = por %p124, %p125
      %p127 = scmp.ne.s32.totalorder %s113, %s114
      %p128 = scmp.eq.s32.totalorder %s20, 3
      %p129 = por %p127, %p128
      %p131 = scmp.ne.s32.totalorder %s114, %s130
      %p132 = scmp.eq.s32.totalorder %s20, 0
      %p133 = por %p131, %p132
      %s135 = sadd.s32 %s134, 1
      %p138 = scmp.eq.s32.totalorder %s14, 3
      %p139 = scmp.ne.s32.totalorder %s134, %s136
      %p140 = scmp.eq.s32.totalorder %s14, 0
      %p141 = por %p139, %p140
      %p142 = scmp.ne.s32.totalorder %s134, %s136
      %p143 = scmp.eq.s32.totalorder %s19, 3
      %p144 = por %p142, %p143
      %p145 = scmp.ne.s32.totalorder %s136, %s137
      %p146 = scmp.eq.s32.totalorder %s19, 0
      %p147 = por %p145, %p146
      %p148 = scmp.ne.s32.totalorder %s136, %s137
      %p149 = scmp.eq.s32.totalorder %s20, 3
      %p150 = por %p148, %p149
      %p152 = scmp.ne.s32.totalorder %s137, %s151
      %p153 = scmp.eq.s32.totalorder %s20, 0
      %p154 = por %p152, %p153
      %s156 = sadd.s32 %s155, 1
      %p159 = scmp.eq.s32.totalorder %s14, 3
      %p160 = scmp.ne.s32.totalorder %s155, %s157
      %p161 = scmp.eq.s32.totalorder %s14, 0
      %p162 = por %p160, %p161
      %p163 = scmp.ne.s32.totalorder %s155, %s157
      %p164 = scmp.eq.s32.totalorder %s19, 3
      %p165 = por %p163, %p164
      %p166 = scmp.ne.s32.totalorder %s157, %s158
      %p167 = scmp.eq.s32.totalorder %s19, 0
      %p168 = por %p166, %p167
      %p169 = scmp.ne.s32.totalorder %s157, %s158
      %p170 = scmp.eq.s32.totalorder %s20, 3
      %p171 = por %p169, %p170
      %p173 = scmp.ne.s32.totalorder %s158, %s172
      %p174 = scmp.eq.s32.totalorder %s20, 0
      %p175 = por %p173, %p174
      %s176 = ssub.s32 %s21, %s33
      %s177 = ssub.s32 %s22, %s29
      %s178 = sor.u32 %s176, %s177
      %p179 = scmp.eq.s32.totalorder %s178, 0
      %s181 = sadd.s32 %s180, 1
      %s182 = scalar_select %p179, %s180, %s181
      %p185 = pneg %p179
      %p186 = scmp.eq.s32.totalorder %s14, 3
      %p187 = por %p185, %p186
      %p188 = scmp.ne.s32.totalorder %s180, %s183
      %p189 = scmp.eq.s32.totalorder %s14, 0
      %p190 = por %p188, %p189
      %p191 = scmp.ne.s32.totalorder %s180, %s183
      %p192 = scmp.eq.s32.totalorder %s19, 3
      %p193 = por %p191, %p192
      %p194 = scmp.ne.s32.totalorder %s183, %s184
      %p195 = scmp.eq.s32.totalorder %s19, 0
      %p196 = por %p194, %p195
      %p197 = scmp.ne.s32.totalorder %s183, %s184
      %p198 = scmp.eq.s32.totalorder %s20, 3
      %p199 = por %p197, %p198
      %p201 = scmp.ne.s32.totalorder %s184, %s200
      %p202 = scmp.eq.s32.totalorder %s20, 0
      %p203 = por %p201, %p202
      %p204 = scmp.le.s32.totalorder 1, %s14
      %p205 = scmp.lt.s32.totalorder %s14, 5
      %p206 = pnand %p204, %p205
      %p207 = pneg %p206
      // Predicated region
      $region9: #{tpu_custom_call.1} parent=5 // pred_check
        _
      $region10: #{tpu_custom_call.1} parent=5 // pred_check_branch
        %209 = sbr.rel (%p206) target = $region12
      $region11: #{tpu_custom_call.1} parent=5 // pred_region
        %s210 = ssub.s32 %s14, 1
        // Predicated region
        $region13: #{tpu_custom_call.1} parent=11 // pred_check
          %p211 = pneg %p147
        $region14: #{tpu_custom_call.1} parent=11 // pred_check_branch
          %213 = sbr.rel (%p211) target = $region16
        $region15: #{tpu_custom_call.1} parent=11 // pred_region
          _
        $region16: #{tpu_custom_call.1} parent=11 // pred_fallthru
          _
        // Predicated region
        $region17: #{tpu_custom_call.1} parent=11 // pred_check
          %p214 = pneg %p168
        $region18: #{tpu_custom_call.1} parent=11 // pred_check_branch
          %216 = sbr.rel (%p214) target = $region20
        $region19: #{tpu_custom_call.1} parent=11 // pred_region
          _
        $region20: #{tpu_custom_call.1} parent=11 // pred_fallthru
          _
      $region12: #{tpu_custom_call.1} parent=5 // pred_fallthru
        _
      %p217 = scmp.lt.s32.totalorder %s14, 4
      // Predicated region
      $region21: #{tpu_custom_call.1} parent=5 // pred_check
        %p218 = pneg %p217
      $region22: #{tpu_custom_call.1} parent=5 // pred_check_branch
        %220 = sbr.rel (%p218) target = $region24
      $region23: #{tpu_custom_call.1} parent=5 // pred_region
        // Predicated region
        $region25: #{tpu_custom_call.1} parent=23 // pred_check
          %p221 = pneg %p48
        $region26: #{tpu_custom_call.1} parent=23 // pred_check_branch
          %223 = sbr.rel (%p221) target = $region28
        $region27: #{tpu_custom_call.1} parent=23 // pred_region
          %s224 = smul.u32 8, %s22
          %p225 = scmp.lt.s32.totalorder %s21, 0
          %s226 = scalar_select %p225, %s21, 0
          %p227 = scmp.lt.s32.totalorder %s224, 31
          %s228 = scalar_select %p227, %s224, 31
          %s229 = smul.addr %s228, 4
          %s230 = smul.addr %s226, 128
          %s231 = sadd.s32 %s229, %s230
          %s232 = smul.addr %s231, 4
          %s233 = scalar_lea.vmem %s0, %s232
          %s234 = smul.u32 8, %s22
        $region28: #{tpu_custom_call.1} parent=23 // pred_fallthru
          _
        // Predicated region
        $region29: #{tpu_custom_call.1} parent=23 // pred_check
          %p235 = pneg %p84
        $region30: #{tpu_custom_call.1} parent=23 // pred_check_branch
          %237 = sbr.rel (%p235) target = $region32
        $region31: #{tpu_custom_call.1} parent=23 // pred_region
          %s238 = smul.u32 %s22, 8
          %s239 = ssub.s32 %s238, 1
          %p240 = scmp.gt.s32.totalorder %s239, 0
          %s241 = scalar_select %p240, %s239, 0
          %p242 = scmp.lt.s32.totalorder %s21, 0
          %s243 = scalar_select %p242, %s21, 0
          %p244 = scmp.lt.s32.totalorder %s241, 31
          %s245 = scalar_select %p244, %s241, 31
          %s246 = smul.addr %s245, 4
          %s247 = smul.addr %s243, 128
          %s248 = sadd.s32 %s246, %s247
          %s249 = smul.addr %s248, 4
          %s250 = scalar_lea.vmem %s1, %s249
          %s251 = smul.u32 %s22, 8
          %s252 = ssub.s32 %s251, 1
          %p253 = scmp.gt.s32.totalorder %s252, 0
          %s254 = scalar_select %p253, %s252, 0
        $region32: #{tpu_custom_call.1} parent=23 // pred_fallthru
          _
        // Predicated region
        $region33: #{tpu_custom_call.1} parent=23 // pred_check
          %p255 = pneg %p120
        $region34: #{tpu_custom_call.1} parent=23 // pred_check_branch
          %257 = sbr.rel (%p255) target = $region36
        $region35: #{tpu_custom_call.1} parent=23 // pred_region
          %s258 = sadd.s32 %s22, 1
          %s259 = smul.u32 %s258, 8
          %p260 = scmp.lt.s32.totalorder %s259, 31
          %s261 = scalar_select %p260, %s259, 31
          %p262 = scmp.lt.s32.totalorder %s21, 0
          %s263 = scalar_select %p262, %s21, 0
          %p264 = scmp.lt.s32.totalorder %s261, 31
          %s265 = scalar_select %p264, %s261, 31
          %s266 = smul.addr %s265, 4
          %s267 = smul.addr %s263, 128
          %s268 = sadd.s32 %s266, %s267
          %s269 = smul.addr %s268, 4
          %s270 = scalar_lea.vmem %s2, %s269
          %s271 = sadd.s32 %s22, 1
          %s272 = smul.u32 %s271, 8
          %p273 = scmp.lt.s32.totalorder %s272, 31
          %s274 = scalar_select %p273, %s272, 31
        $region36: #{tpu_custom_call.1} parent=23 // pred_fallthru
          _
      $region24: #{tpu_custom_call.1} parent=5 // pred_fallthru
        _
      %p275 = scmp.le.s32.totalorder 1, %s14
      %p276 = scmp.lt.s32.totalorder %s14, 5
      %p277 = pnand %p275, %p276
      %p278 = pneg %p277
      // Predicated region
      $region37: #{tpu_custom_call.1} parent=5 // pred_check
        _
      $region38: #{tpu_custom_call.1} parent=5 // pred_check_branch
        %280 = sbr.rel (%p277) target = $region40
      $region39: #{tpu_custom_call.1} parent=5 // pred_region
        %s281 = ssub.s32 %s14, 1
        %s282 = smul.u32 8, %s24
        %p283 = scmp.lt.s32.totalorder %s23, 0
        %s284 = scalar_select %p283, %s23, 0
        %p285 = scmp.lt.s32.totalorder %s282, 31
        %s286 = scalar_select %p285, %s282, 31
        %s287 = smul.addr %s286, 4
        %s288 = smul.addr %s284, 128
        %s289 = sadd.s32 %s287, %s288
        %s290 = smul.addr %s289, 4
        %s291 = scalar_lea.vmem %s0, %s290
        %p292 = pneg %p54
        %p293 = pneg %p51
        %s294 = smul.u32 %s24, 8
        %s295 = ssub.s32 %s294, 1
        %p296 = scmp.gt.s32.totalorder %s295, 0
        %s297 = scalar_select %p296, %s295, 0
        %p298 = scmp.lt.s32.totalorder %s23, 0
        %s299 = scalar_select %p298, %s23, 0
        %p300 = scmp.lt.s32.totalorder %s297, 31
        %s301 = scalar_select %p300, %s297, 31
        %s302 = smul.addr %s301, 4
        %s303 = smul.addr %s299, 128
        %s304 = sadd.s32 %s302, %s303
        %s305 = smul.addr %s304, 4
        %s306 = scalar_lea.vmem %s1, %s305
        %p307 = pneg %p90
        %p308 = pneg %p87
        %s309 = sadd.s32 %s24, 1
        %s310 = smul.u32 %s309, 8
        %p311 = scmp.lt.s32.totalorder %s310, 31
        %s312 = scalar_select %p311, %s310, 31
        %p313 = scmp.lt.s32.totalorder %s23, 0
        %s314 = scalar_select %p313, %s23, 0
        %p315 = scmp.lt.s32.totalorder %s312, 31
        %s316 = scalar_select %p315, %s312, 31
        %s317 = smul.addr %s316, 4
        %s318 = smul.addr %s314, 128
        %s319 = sadd.s32 %s317, %s318
        %s320 = smul.addr %s319, 4
        %s321 = scalar_lea.vmem %s2, %s320
        %p322 = pneg %p126
        %p323 = pneg %p123
        %p324 = pneg %p147
        %p325 = pneg %p144
        %p326 = pneg %p168
        %p327 = pneg %p165
        %p328 = pneg %p196
        %p329 = pneg %p193
        %s330 = sand.u32 %s183, 1
        %s331 = scalar_lea.sflag [#allocation3], %s330
        %s332 = sand.u32 %s183, 1
        %s333 = smul.addr %s332, 128
        %s334 = scalar_lea.vmem [#allocation2], %s333
        %s335 = smul.u32 8, %s24
        %p336 = scmp.lt.s32.totalorder %s23, 0
        %s337 = scalar_select %p336, %s23, 0
        %p338 = scmp.lt.s32.totalorder %s335, 31
        %s339 = scalar_select %p338, %s335, 31
        %s340 = smul.addr %s339, 4
        %s341 = smul.addr %s337, 128
        %s342 = sadd.s32 %s340, %s341
        %s343 = smul.addr %s342, 4
        %s344 = scalar_lea.vmem %s0, %s343
        %s345 = smul.u32 8, %s24
        %s346 = smul.u32 %s24, 8
        %s347 = ssub.s32 %s346, 1
        %p348 = scmp.gt.s32.totalorder %s347, 0
        %s349 = scalar_select %p348, %s347, 0
        %p350 = scmp.lt.s32.totalorder %s23, 0
        %s351 = scalar_select %p350, %s23, 0
        %p352 = scmp.lt.s32.totalorder %s349, 31
        %s353 = scalar_select %p352, %s349, 31
        %s354 = smul.addr %s353, 4
        %s355 = smul.addr %s351, 128
        %s356 = sadd.s32 %s354, %s355
        %s357 = smul.addr %s356, 4
        %s358 = scalar_lea.vmem %s1, %s357
        %s359 = smul.u32 %s24, 8
        %s360 = ssub.s32 %s359, 1
        %p361 = scmp.gt.s32.totalorder %s360, 0
        %s362 = scalar_select %p361, %s360, 0
        %s363 = sadd.s32 %s24, 1
        %s364 = smul.u32 %s363, 8
        %p365 = scmp.lt.s32.totalorder %s364, 31
        %s366 = scalar_select %p365, %s364, 31
        %p367 = scmp.lt.s32.totalorder %s23, 0
        %s368 = scalar_select %p367, %s23, 0
        %p369 = scmp.lt.s32.totalorder %s366, 31
        %s370 = scalar_select %p369, %s366, 31
        %s371 = smul.addr %s370, 4
        %s372 = smul.addr %s368, 128
        %s373 = sadd.s32 %s371, %s372
        %s374 = smul.addr %s373, 4
        %s375 = scalar_lea.vmem %s2, %s374
        %s376 = sadd.s32 %s24, 1
        %s377 = smul.u32 %s376, 8
        %p378 = scmp.lt.s32.totalorder %s377, 31
        %s379 = scalar_select %p378, %s377, 31
        %s380 = smul.u32 8, %s24
        %p382 = scmp.gt.s32.totalorder %s24, 0
        %s383 = scalar_select %p382, 1, 0
        %s384 = scvt.s32.f32 %s383
        %p385 = scmp.lt.s32.totalorder %s24, 3
        %s386 = scalar_select %p385, 1, 0
        %s387 = scvt.s32.f32 %s386
        %v388 = vld [vmem:[%s358] sm:$0xf]
        %v389 = vld [vmem:[%s358 + $0x4] sm:$0xf]
        %v390 = vld [vmem:[%s358 + $0x8] sm:$0xf]
        %v391 = vld [vmem:[%s358 + $0xc] sm:$0xf]
        %v392 = vunpack.c.l.bf16 %v388
        %v393 = vunpack.c.l.bf16 %v389
        %v394 = vunpack.c.l.bf16 %v390
        %v395 = vunpack.c.l.bf16 %v391
        %v396 = vstv %s384
        %v397 = vmul.f32 %v392, %v396
        %v398 = vmul.f32 %v393, %v396
        %v399 = vmul.f32 %v394, %v396
        %v400 = vmul.f32 %v395, %v396
        %v401 = vpack.c.bf16 %v398, %v397
        %v402 = vpack.c.bf16 %v400, %v399
        %v403 = vld [vmem:[%s375] sm:$0xf]
        %v404 = vld [vmem:[%s375 + $0x4] sm:$0xf]
        %v405 = vld [vmem:[%s375 + $0x8] sm:$0xf]
        %v406 = vld [vmem:[%s375 + $0xc] sm:$0xf]
        %v407 = vunpack.c.l.bf16 %v403
        %v408 = vunpack.c.l.bf16 %v404
        %v409 = vunpack.c.l.bf16 %v405
        %v410 = vunpack.c.l.bf16 %v406
        %v411 = vstv %s387
        %v412 = vmul.f32 %v407, %v411
        %v413 = vmul.f32 %v408, %v411
        %v414 = vmul.f32 %v409, %v411
        %v415 = vmul.f32 %v410, %v411
        %v416 = vpack.c.bf16 %v413, %v412
        %v417 = vpack.c.bf16 %v415, %v414
        %v418 = vld [vmem:[%s344] sm:$0xf]
        %v419 = vld [vmem:[%s344 + $0x4] sm:$0xf]
        %v420 = vld [vmem:[%s344 + $0x8] sm:$0xf]
        %v421 = vld [vmem:[%s344 + $0xc] sm:$0xf]
        %v422 = vld [vmem:[%s344 + $0x10] sm:$0xf]
        %v423 = vld [vmem:[%s344 + $0x14] sm:$0xf]
        %v424 = vld [vmem:[%s344 + $0x18] sm:$0xf]
        %v425 = vld [vmem:[%s344 + $0x1c] sm:$0xf]
        %v426 = vld [vmem:[%s344 + $0x20] sm:$0xf]
        %v427 = vld [vmem:[%s344 + $0x24] sm:$0xf]
        %v428 = vld [vmem:[%s344 + $0x28] sm:$0xf]
        %v429 = vld [vmem:[%s344 + $0x2c] sm:$0xf]
        %v430 = vld [vmem:[%s344 + $0x30] sm:$0xf]
        %v431 = vld [vmem:[%s344 + $0x34] sm:$0xf]
        %v432 = vld [vmem:[%s344 + $0x38] sm:$0xf]
        %v433 = vld [vmem:[%s344 + $0x3c] sm:$0xf]
        %v434 = vld [vmem:[%s344 + $0x40] sm:$0xf]
        %v435 = vld [vmem:[%s344 + $0x44] sm:$0xf]
        %v436 = vld [vmem:[%s344 + $0x48] sm:$0xf]
        %v437 = vld [vmem:[%s344 + $0x4c] sm:$0xf]
        %v438 = vld [vmem:[%s344 + $0x50] sm:$0xf]
        %v439 = vld [vmem:[%s344 + $0x54] sm:$0xf]
        %v440 = vld [vmem:[%s344 + $0x58] sm:$0xf]
        %v441 = vld [vmem:[%s344 + $0x5c] sm:$0xf]
        %v442 = vld [vmem:[%s344 + $0x60] sm:$0xf]
        %v443 = vld [vmem:[%s344 + $0x64] sm:$0xf]
        %v444 = vld [vmem:[%s344 + $0x68] sm:$0xf]
        %v445 = vld [vmem:[%s344 + $0x6c] sm:$0xf]
        %v446 = vld [vmem:[%s344 + $0x70] sm:$0xf]
        %v447 = vld [vmem:[%s344 + $0x74] sm:$0xf]
        %v448 = vld [vmem:[%s344 + $0x78] sm:$0xf]
        %v449 = vld [vmem:[%s344 + $0x7c] sm:$0xf]
        %v482 = vunpack.c.l.b16 %v418
        %v483 = vunpack.c.l.b16 %v419
        %v484 = vunpack.c.l.b16 %v420
        %v485 = vunpack.c.l.b16 %v421
        %v486 = vunpack.c.l.b16 %v422
        %v487 = vunpack.c.l.b16 %v423
        %v488 = vunpack.c.l.b16 %v424
        %v489 = vunpack.c.l.b16 %v425
        %v490 = vunpack.c.l.b16 %v426
        %v491 = vunpack.c.l.b16 %v427
        %v492 = vunpack.c.l.b16 %v428
        %v493 = vunpack.c.l.b16 %v429
        %v494 = vunpack.c.l.b16 %v430
        %v495 = vunpack.c.l.b16 %v431
        %v496 = vunpack.c.l.b16 %v432
        %v497 = vunpack.c.l.b16 %v433
        %v498 = vunpack.c.l.b16 %v434
        %v499 = vunpack.c.l.b16 %v435
        %v500 = vunpack.c.l.b16 %v436
        %v501 = vunpack.c.l.b16 %v437
        %v502 = vunpack.c.l.b16 %v438
        %v503 = vunpack.c.l.b16 %v439
        %v504 = vunpack.c.l.b16 %v440
        %v505 = vunpack.c.l.b16 %v441
        %v506 = vunpack.c.l.b16 %v442
        %v507 = vunpack.c.l.b16 %v443
        %v508 = vunpack.c.l.b16 %v444
        %v509 = vunpack.c.l.b16 %v445
        %v510 = vunpack.c.l.b16 %v446
        %v511 = vunpack.c.l.b16 %v447
        %v512 = vunpack.c.l.b16 %v448
        %v513 = vunpack.c.l.b16 %v449
        %v514 = vpack.c.b16 %v483, %v482
        %v515 = vpack.c.b16 %v485, %v484
        %v516 = vpack.c.b16 %v487, %v486
        %v517 = vpack.c.b16 %v489, %v488
        %v518 = vpack.c.b16 %v491, %v490
        %v519 = vpack.c.b16 %v493, %v492
        %v520 = vpack.c.b16 %v495, %v494
        %v521 = vpack.c.b16 %v497, %v496
        %v522 = vpack.c.b16 %v499, %v498
        %v523 = vpack.c.b16 %v501, %v500
        %v524 = vpack.c.b16 %v503, %v502
        %v525 = vpack.c.b16 %v505, %v504
        %v526 = vpack.c.b16 %v507, %v506
        %v527 = vpack.c.b16 %v509, %v508
        %v528 = vpack.c.b16 %v511, %v510
        %v529 = vpack.c.b16 %v513, %v512
        %vm530 = vsmask.f32 256
        %v532 = vshrl.u32 %v401, 16
        %v534 = vrot.slane %v532, 7
        %v535 = vshll.u32 %v401, 16
        %v537 = vor.u32 %v534, %v535
        %v539 = vshrl.u32 %v402, 16
        %v541 = vrot.slane %v539, 7
        %v542 = vshll.u32 %v402, 16
        %v544 = vor.u32 %v541, %v542
        %v545 = vsel %vm530, %v534, %v544
        %v547 = vshrl.u32 %v514, 16
        %v549 = vrot.slane %v547, 7
        %v550 = vshll.u32 %v514, 16
        %v552 = vor.u32 %v549, %v550
        %v554 = vshrl.u32 %v515, 16
        %v556 = vrot.slane %v554, 7
        %v557 = vshll.u32 %v515, 16
        %v559 = vor.u32 %v556, %v557
        %v560 = vsel %vm530, %v549, %v559
        %v562 = vshrl.u32 %v516, 16
        %v564 = vrot.slane %v562, 7
        %v565 = vshll.u32 %v516, 16
        %v567 = vor.u32 %v564, %v565
        %v569 = vshrl.u32 %v517, 16
        %v571 = vrot.slane %v569, 7
        %v572 = vshll.u32 %v517, 16
        %v574 = vor.u32 %v571, %v572
        %v575 = vsel %vm530, %v564, %v574
        %v577 = vshrl.u32 %v518, 16
        %v579 = vrot.slane %v577, 7
        %v580 = vshll.u32 %v518, 16
        %v582 = vor.u32 %v579, %v580
        %v584 = vshrl.u32 %v519, 16
        %v586 = vrot.slane %v584, 7
        %v587 = vshll.u32 %v519, 16
        %v589 = vor.u32 %v586, %v587
        %v590 = vsel %vm530, %v579, %v589
        %v592 = vshrl.u32 %v520, 16
        %v594 = vrot.slane %v592, 7
        %v595 = vshll.u32 %v520, 16
        %v597 = vor.u32 %v594, %v595
        %v599 = vshrl.u32 %v521, 16
        %v601 = vrot.slane %v599, 7
        %v602 = vshll.u32 %v521, 16
        %v604 = vor.u32 %v601, %v602
        %v605 = vsel %vm530, %v594, %v604
        %v607 = vshrl.u32 %v522, 16
        %v609 = vrot.slane %v607, 7
        %v610 = vshll.u32 %v522, 16
        %v612 = vor.u32 %v609, %v610
        %v614 = vshrl.u32 %v523, 16
        %v616 = vrot.slane %v614, 7
        %v617 = vshll.u32 %v523, 16
        %v619 = vor.u32 %v616, %v617
        %v620 = vsel %vm530, %v609, %v619
        %v622 = vshrl.u32 %v524, 16
        %v624 = vrot.slane %v622, 7
        %v625 = vshll.u32 %v524, 16
        %v627 = vor.u32 %v624, %v625
        %v629 = vshrl.u32 %v525, 16
        %v631 = vrot.slane %v629, 7
        %v632 = vshll.u32 %v525, 16
        %v634 = vor.u32 %v631, %v632
        %v635 = vsel %vm530, %v624, %v634
        %v637 = vshrl.u32 %v526, 16
        %v639 = vrot.slane %v637, 7
        %v640 = vshll.u32 %v526, 16
        %v642 = vor.u32 %v639, %v640
        %v644 = vshrl.u32 %v527, 16
        %v646 = vrot.slane %v644, 7
        %v647 = vshll.u32 %v527, 16
        %v649 = vor.u32 %v646, %v647
        %v650 = vsel %vm530, %v639, %v649
        %v652 = vshrl.u32 %v528, 16
        %v654 = vrot.slane %v652, 7
        %v655 = vshll.u32 %v528, 16
        %v657 = vor.u32 %v654, %v655
        %v659 = vshrl.u32 %v529, 16
        %v661 = vrot.slane %v659, 7
        %v662 = vshll.u32 %v529, 16
        %v664 = vor.u32 %v661, %v662
        %v665 = vsel %vm530, %v654, %v664
        %v667 = vshrl.u32 %v416, 16
        %v669 = vrot.slane %v667, 7
        %v670 = vshll.u32 %v416, 16
        %v672 = vor.u32 %v669, %v670
        %v674 = vshrl.u32 %v417, 16
        %v676 = vrot.slane %v674, 7
        %v677 = vshll.u32 %v417, 16
        %v679 = vor.u32 %v676, %v677
        %v680 = vsel %vm530, %v669, %v679
        %vm701 = vcmask 1040384
        %vm702 = vmand %vm701, %vm530
        %v703 = vsel %vm702, 0, %v537
        %v704 = vsel %vm702, 0, %v552
        %v705 = vsel %vm702, 0, %v567
        %v706 = vsel %vm702, 0, %v582
        %v707 = vsel %vm702, 0, %v597
        %v708 = vsel %vm702, 0, %v612
        %v709 = vsel %vm702, 0, %v627
        %v710 = vsel %vm702, 0, %v642
        %v711 = vsel %vm702, 0, %v657
        %v712 = vsel %vm702, 0, %v672
        %v713 = vsel %vm702, %v541, 0
        %v714 = vsel %vm702, %v556, 0
        %v715 = vsel %vm702, %v571, 0
        %v716 = vsel %vm702, %v586, 0
        %v717 = vsel %vm702, %v601, 0
        %v718 = vsel %vm702, %v616, 0
        %v719 = vsel %vm702, %v631, 0
        %v720 = vsel %vm702, %v646, 0
        %v721 = vsel %vm702, %v661, 0
        %v722 = vsel %vm702, %v676, 0
        %vm723 = vsmask.f32 7424
        %v725 = vshrl.u32 %v703, 16
        %v727 = vshll.u32 %v703, 16
        %v729 = vrot.slane %v727, 1
        %v730 = vor.u32 %v725, %v729
        %v732 = vshll.u32 %v545, 16
        %v734 = vrot.slane %v732, 1
        %v735 = vsel %vm723, %v730, %v734
        %v736 = vshrl.u32 %v545, 16
        %v738 = vor.u32 %v736, %v734
        %v740 = vshll.u32 %v713, 16
        %v742 = vrot.slane %v740, 1
        %v743 = vsel %vm723, %v738, %v742
        %v745 = vshrl.u32 %v704, 16
        %v747 = vshll.u32 %v704, 16
        %v749 = vrot.slane %v747, 1
        %v750 = vor.u32 %v745, %v749
        %v752 = vshll.u32 %v560, 16
        %v754 = vrot.slane %v752, 1
        %v755 = vsel %vm723, %v750, %v754
        %v756 = vshrl.u32 %v560, 16
        %v758 = vor.u32 %v756, %v754
        %v760 = vshll.u32 %v714, 16
        %v762 = vrot.slane %v760, 1
        %v763 = vsel %vm723, %v758, %v762
        %v765 = vshrl.u32 %v705, 16
        %v767 = vshll.u32 %v705, 16
        %v769 = vrot.slane %v767, 1
        %v770 = vor.u32 %v765, %v769
        %v772 = vshll.u32 %v575, 16
        %v774 = vrot.slane %v772, 1
        %v775 = vsel %vm723, %v770, %v774
        %v776 = vshrl.u32 %v575, 16
        %v778 = vor.u32 %v776, %v774
        %v780 = vshll.u32 %v715, 16
        %v782 = vrot.slane %v780, 1
        %v783 = vsel %vm723, %v778, %v782
        %v785 = vshrl.u32 %v706, 16
        %v787 = vshll.u32 %v706, 16
        %v789 = vrot.slane %v787, 1
        %v790 = vor.u32 %v785, %v789
        %v792 = vshll.u32 %v590, 16
        %v794 = vrot.slane %v792, 1
        %v795 = vsel %vm723, %v790, %v794
        %v796 = vshrl.u32 %v590, 16
        %v798 = vor.u32 %v796, %v794
        %v800 = vshll.u32 %v716, 16
        %v802 = vrot.slane %v800, 1
        %v803 = vsel %vm723, %v798, %v802
        %v805 = vshrl.u32 %v707, 16
        %v807 = vshll.u32 %v707, 16
        %v809 = vrot.slane %v807, 1
        %v810 = vor.u32 %v805, %v809
        %v812 = vshll.u32 %v605, 16
        %v814 = vrot.slane %v812, 1
        %v815 = vsel %vm723, %v810, %v814
        %v816 = vshrl.u32 %v605, 16
        %v818 = vor.u32 %v816, %v814
        %v820 = vshll.u32 %v717, 16
        %v822 = vrot.slane %v820, 1
        %v823 = vsel %vm723, %v818, %v822
        %v825 = vshrl.u32 %v708, 16
        %v827 = vshll.u32 %v708, 16
        %v829 = vrot.slane %v827, 1
        %v830 = vor.u32 %v825, %v829
        %v832 = vshll.u32 %v620, 16
        %v834 = vrot.slane %v832, 1
        %v835 = vsel %vm723, %v830, %v834
        %v836 = vshrl.u32 %v620, 16
        %v838 = vor.u32 %v836, %v834
        %v840 = vshll.u32 %v718, 16
        %v842 = vrot.slane %v840, 1
        %v843 = vsel %vm723, %v838, %v842
        %v845 = vshrl.u32 %v709, 16
        %v847 = vshll.u32 %v709, 16
        %v849 = vrot.slane %v847, 1
        %v850 = vor.u32 %v845, %v849
        %v852 = vshll.u32 %v635, 16
        %v854 = vrot.slane %v852, 1
        %v855 = vsel %vm723, %v850, %v854
        %v856 = vshrl.u32 %v635, 16
        %v858 = vor.u32 %v856, %v854
        %v860 = vshll.u32 %v719, 16
        %v862 = vrot.slane %v860, 1
        %v863 = vsel %vm723, %v858, %v862
        %v865 = vshrl.u32 %v710, 16
        %v867 = vshll.u32 %v710, 16
        %v869 = vrot.slane %v867, 1
        %v870 = vor.u32 %v865, %v869
        %v872 = vshll.u32 %v650, 16
        %v874 = vrot.slane %v872, 1
        %v875 = vsel %vm723, %v870, %v874
        %v876 = vshrl.u32 %v650, 16
        %v878 = vor.u32 %v876, %v874
        %v880 = vshll.u32 %v720, 16
        %v882 = vrot.slane %v880, 1
        %v883 = vsel %vm723, %v878, %v882
        %884 = vrot.lane.b32.xlu0 %v735, 3
        %v885 = vpop.permute.xlu0 %884
        %886 = vrot.lane.b32.xlu0 %v743, 3
        %v887 = vpop.permute.xlu0 %886
        %888 = vrot.lane.b32.xlu0 %v755, 3
        %v889 = vpop.permute.xlu0 %888
        %890 = vrot.lane.b32.xlu0 %v763, 3
        %v891 = vpop.permute.xlu0 %890
        %892 = vrot.lane.b32.xlu0 %v775, 3
        %v893 = vpop.permute.xlu0 %892
        %894 = vrot.lane.b32.xlu0 %v783, 3
        %v895 = vpop.permute.xlu0 %894
        %896 = vrot.lane.b32.xlu0 %v795, 3
        %v897 = vpop.permute.xlu0 %896
        %898 = vrot.lane.b32.xlu0 %v803, 3
        %v899 = vpop.permute.xlu0 %898
        %900 = vrot.lane.b32.xlu0 %v815, 3
        %v901 = vpop.permute.xlu0 %900
        %902 = vrot.lane.b32.xlu0 %v823, 3
        %v903 = vpop.permute.xlu0 %902
        %904 = vrot.lane.b32.xlu0 %v835, 3
        %v905 = vpop.permute.xlu0 %904
        %906 = vrot.lane.b32.xlu0 %v843, 3
        %v907 = vpop.permute.xlu0 %906
        %908 = vrot.lane.b32.xlu0 %v855, 3
        %v909 = vpop.permute.xlu0 %908
        %910 = vrot.lane.b32.xlu0 %v863, 3
        %v911 = vpop.permute.xlu0 %910
        %912 = vrot.lane.b32.xlu0 %v875, 3
        %v913 = vpop.permute.xlu0 %912
        %914 = vrot.lane.b32.xlu0 %v883, 3
        %v915 = vpop.permute.xlu0 %914
        %vm932 = vcmask 1046528
        %v933 = vrot.slane %v703, 1
        %v934 = vrot.slane %v545, 1
        %v935 = vsel %vm932, %v933, %v934
        %v936 = vrot.slane %v713, 1
        %v937 = vsel %vm932, %v934, %v936
        %v938 = vrot.slane %v704, 1
        %v939 = vrot.slane %v560, 1
        %v940 = vsel %vm932, %v938, %v939
        %v941 = vrot.slane %v714, 1
        %v942 = vsel %vm932, %v939, %v941
        %v943 = vrot.slane %v705, 1
        %v944 = vrot.slane %v575, 1
        %v945 = vsel %vm932, %v943, %v944
        %v946 = vrot.slane %v715, 1
        %v947 = vsel %vm932, %v944, %v946
        %v948 = vrot.slane %v706, 1
        %v949 = vrot.slane %v590, 1
        %v950 = vsel %vm932, %v948, %v949
        %v951 = vrot.slane %v716, 1
        %v952 = vsel %vm932, %v949, %v951
        %v953 = vrot.slane %v707, 1
        %v954 = vrot.slane %v605, 1
        %v955 = vsel %vm932, %v953, %v954
        %v956 = vrot.slane %v717, 1
        %v957 = vsel %vm932, %v954, %v956
        %v958 = vrot.slane %v708, 1
        %v959 = vrot.slane %v620, 1
        %v960 = vsel %vm932, %v958, %v959
        %v961 = vrot.slane %v718, 1
        %v962 = vsel %vm932, %v959, %v961
        %v963 = vrot.slane %v709, 1
        %v964 = vrot.slane %v635, 1
        %v965 = vsel %vm932, %v963, %v964
        %v966 = vrot.slane %v719, 1
        %v967 = vsel %vm932, %v964, %v966
        %v968 = vrot.slane %v710, 1
        %v969 = vrot.slane %v650, 1
        %v970 = vsel %vm932, %v968, %v969
        %v971 = vrot.slane %v720, 1
        %v972 = vsel %vm932, %v969, %v971
        %973 = vrot.lane.b32.xlu0 %v935, 6
        %v974 = vpop.permute.xlu0 %973
        %975 = vrot.lane.b32.xlu0 %v937, 6
        %v976 = vpop.permute.xlu0 %975
        %977 = vrot.lane.b32.xlu0 %v940, 6
        %v978 = vpop.permute.xlu0 %977
        %979 = vrot.lane.b32.xlu0 %v942, 6
        %v980 = vpop.permute.xlu0 %979
        %981 = vrot.lane.b32.xlu0 %v945, 6
        %v982 = vpop.permute.xlu0 %981
        %983 = vrot.lane.b32.xlu0 %v947, 6
        %v984 = vpop.permute.xlu0 %983
        %985 = vrot.lane.b32.xlu0 %v950, 6
        %v986 = vpop.permute.xlu0 %985
        %987 = vrot.lane.b32.xlu0 %v952, 6
        %v988 = vpop.permute.xlu0 %987
        %989 = vrot.lane.b32.xlu0 %v955, 6
        %v990 = vpop.permute.xlu0 %989
        %991 = vrot.lane.b32.xlu0 %v957, 6
        %v992 = vpop.permute.xlu0 %991
        %993 = vrot.lane.b32.xlu0 %v960, 6
        %v994 = vpop.permute.xlu0 %993
        %995 = vrot.lane.b32.xlu0 %v962, 6
        %v996 = vpop.permute.xlu0 %995
        %997 = vrot.lane.b32.xlu0 %v965, 6
        %v998 = vpop.permute.xlu0 %997
        %999 = vrot.lane.b32.xlu0 %v967, 6
        %v1000 = vpop.permute.xlu0 %999
        %1001 = vrot.lane.b32.xlu0 %v970, 6
        %v1002 = vpop.permute.xlu0 %1001
        %1003 = vrot.lane.b32.xlu0 %v972, 6
        %v1004 = vpop.permute.xlu0 %1003
        %vm1005 = vcmask 23552
        %v1007 = vsel %vm1005, %v703, %v885
        %v1009 = vsel %vm1005, %v545, %v887
        %v1011 = vsel %vm1005, %v704, %v889
        %v1013 = vsel %vm1005, %v560, %v891
        %v1015 = vsel %vm1005, %v705, %v893
        %v1017 = vsel %vm1005, %v575, %v895
        %v1019 = vsel %vm1005, %v706, %v897
        %v1021 = vsel %vm1005, %v590, %v899
        %v1023 = vsel %vm1005, %v707, %v901
        %v1025 = vsel %vm1005, %v605, %v903
        %v1027 = vsel %vm1005, %v708, %v905
        %v1029 = vsel %vm1005, %v620, %v907
        %v1031 = vsel %vm1005, %v709, %v909
        %v1033 = vsel %vm1005, %v635, %v911
        %v1035 = vsel %vm1005, %v710, %v913
        %v1037 = vsel %vm1005, %v650, %v915
        %vm1038 = vcmask 48128
        %v1040 = vsel %vm1038, %v1007, %v974
        %v1042 = vsel %vm1038, %v1009, %v976
        %v1044 = vsel %vm1038, %v1011, %v978
        %v1046 = vsel %vm1038, %v1013, %v980
        %v1048 = vsel %vm1038, %v1015, %v982
        %v1050 = vsel %vm1038, %v1017, %v984
        %v1052 = vsel %vm1038, %v1019, %v986
        %v1054 = vsel %vm1038, %v1021, %v988
        %v1056 = vsel %vm1038, %v1023, %v990
        %v1058 = vsel %vm1038, %v1025, %v992
        %v1060 = vsel %vm1038, %v1027, %v994
        %v1062 = vsel %vm1038, %v1029, %v996
        %v1064 = vsel %vm1038, %v1031, %v998
        %v1066 = vsel %vm1038, %v1033, %v1000
        %v1068 = vsel %vm1038, %v1035, %v1002
        %v1070 = vsel %vm1038, %v1037, %v1004
        %v1071 = vld [vmem:[%s3] sm:$0xf]
        %v1072 = vld [vmem:[%s3 + $0x4] sm:$0x1]
        %v1074 = vshrl.u32 %v711, 16
        %v1076 = vshll.u32 %v711, 16
        %v1078 = vrot.slane %v1076, 1
        %v1079 = vor.u32 %v1074, %v1078
        %v1081 = vshll.u32 %v665, 16
        %v1083 = vrot.slane %v1081, 1
        %v1084 = vsel %vm723, %v1079, %v1083
        %v1085 = vshrl.u32 %v665, 16
        %v1087 = vor.u32 %v1085, %v1083
        %v1089 = vshll.u32 %v721, 16
        %v1091 = vrot.slane %v1089, 1
        %v1092 = vsel %vm723, %v1087, %v1091
        %1093 = vrot.lane.b32.xlu0 %v1084, 3
        %v1094 = vpop.permute.xlu0 %1093
        %1095 = vrot.lane.b32.xlu0 %v1092, 3
        %v1096 = vpop.permute.xlu0 %1095
        %v1099 = vrot.slane %v711, 1
        %v1100 = vrot.slane %v665, 1
        %v1101 = vsel %vm932, %v1099, %v1100
        %v1102 = vrot.slane %v721, 1
        %v1103 = vsel %vm932, %v1100, %v1102
        %1104 = vrot.lane.b32.xlu0 %v1101, 6
        %v1105 = vpop.permute.xlu0 %1104
        %1106 = vrot.lane.b32.xlu0 %v1103, 6
        %v1107 = vpop.permute.xlu0 %1106
        %v1109 = vsel %vm1005, %v711, %v1094
        %v1111 = vsel %vm1005, %v665, %v1096
        %v1113 = vsel %vm1038, %v1109, %v1105
        %v1115 = vsel %vm1038, %v1111, %v1107
        %s1116 = scalar_lea.vmem %s3, 8
        %v1117 = vld [vmem:[%s1116] sm:$0xf]
        %v1118 = vld [vmem:[%s1116 + $0x4] sm:$0x1]
        %v1121 = vunpack.c.l.b16 %v1117
        %v1122 = vunpack.c.l.b16 %v1118
        %v1123 = vpack.c.b16 %v1122, %v1121
        %vm1124 = vcmask 72704
        %v1125 = vsel %vm1124, %v1044, 0
        %v1127 = vsel %vm1124, %v1046, 0
        %v1129 = vsel %vm1124, %v1048, 0
        %v1131 = vsel %vm1124, %v1050, 0
        %v1133 = vsel %vm1124, %v1052, 0
        %v1135 = vsel %vm1124, %v1054, 0
        %v1137 = vsel %vm1124, %v1056, 0
        %v1139 = vsel %vm1124, %v1058, 0
        %v1141 = vsel %vm1124, %v1060, 0
        %v1143 = vsel %vm1124, %v1062, 0
        %v1145 = vsel %vm1124, %v1064, 0
        %v1147 = vsel %vm1124, %v1066, 0
        %v1149 = vsel %vm1124, %v1068, 0
        %v1151 = vsel %vm1124, %v1070, 0
        %v1153 = vsel %vm1124, %v1113, 0
        %v1155 = vsel %vm1124, %v1115, 0
        %vm1157 = vcmask 1043456
        %vm1158 = vcmask 1044480
        %v1159 = vsel %vm1157, 4294967295, 65535
        %v1160 = vsel %vm1158, %v1159, 0
        %v1162 = vand.u32 %v1123, %v1160
        %1164 = vmatprep.subr.bf16.mxu0 0
        %1165 = vmatpush1.bf16.msra.mxu0 0
        %1166 = vmatprep.subr.bf16.mxu0 0
        %1167 = vmatpush1.bf16.msra.mxu0 0
        %1168 = vmatprep.subr.bf16.mxu0 0
        %1169 = vmatpush1.bf16.msra.mxu0 0
        %1170 = vmatprep.subr.bf16.mxu0 0
        %1171 = vmatpush1.bf16.msra.mxu0 0
        %1172 = vmatprep.subr.bf16.mxu0 0
        %1173 = vmatpush1.bf16.msra.mxu0 0
        %1174 = vmatprep.subr.bf16.mxu0 0
        %1175 = vmatpush1.bf16.msra.mxu0 0
        %1176 = vmatprep.subr.bf16.mxu0 0
        %1177 = vmatpush1.bf16.msra.mxu0 0
        %1178 = vmatprep.subr.bf16.mxu0 0
        %1179 = vmatpush1.bf16.msra.mxu0 %v1162
        %1180 = vmatprep.subr.bf16.mxu0 0
        %1181 = vmatpush2.bf16.msra.mxu0 0
        %1182 = vmatprep.subr.bf16.mxu0 0
        %1183 = vmatpush2.bf16.msra.mxu0 0
        %1184 = vmatprep.subr.bf16.mxu0 0
        %1185 = vmatpush2.bf16.msra.mxu0 0
        %1186 = vmatprep.subr.bf16.mxu0 0
        %1187 = vmatpush2.bf16.msra.mxu0 0
        %1188 = vmatprep.subr.bf16.mxu0 0
        %1189 = vmatpush2.bf16.msra.mxu0 0
        %1190 = vmatprep.subr.bf16.mxu0 0
        %1191 = vmatpush2.bf16.msra.mxu0 0
        %1192 = vmatprep.subr.bf16.mxu0 0
        %1193 = vmatpush2.bf16.msra.mxu0 0
        %1194 = vmatprep.subr.bf16.mxu0 0
        %1195 = vmatpush2.bf16.msra.mxu0 0
        %1196 = vmatprep.mubr.bf16.mxu0 0
        %1197 = vmatmul.mubr.bf16.gmra.mxu0 %v1125
        %v1198 = vpop.f32.mrf.mxu0
        %v1199 = vadd.f32 0.0, %v1198
        %v1200 = vpop.f32.mrf.mxu0
        %v1201 = vpop.f32.mrf.mxu0
        %v1202 = vadd.f32 0.0, %v1201
        %v1203 = vpop.f32.mrf.mxu0
        %1204 = vmatprep.mubr.bf16.mxu0 0
        %1205 = vmatmul.mubr.bf16.gmra.mxu0 %v1127
        %v1206 = vpop.f32.mrf.mxu0
        %v1207 = vadd.f32 0.0, %v1206
        %v1208 = vpop.f32.mrf.mxu0
        %v1209 = vpop.f32.mrf.mxu0
        %v1210 = vadd.f32 0.0, %v1209
        %v1211 = vpop.f32.mrf.mxu0
        %1212 = vmatprep.mubr.bf16.mxu0 0
        %1213 = vmatmul.mubr.bf16.gmra.mxu0 %v1129
        %v1214 = vpop.f32.mrf.mxu0
        %v1215 = vadd.f32 0.0, %v1214
        %v1216 = vpop.f32.mrf.mxu0
        %v1217 = vpop.f32.mrf.mxu0
        %v1218 = vadd.f32 0.0, %v1217
        %v1219 = vpop.f32.mrf.mxu0
        %1220 = vmatprep.mubr.bf16.mxu0 0
        %1221 = vmatmul.mubr.bf16.gmra.mxu0 %v1131
        %v1222 = vpop.f32.mrf.mxu0
        %v1223 = vadd.f32 0.0, %v1222
        %v1224 = vpop.f32.mrf.mxu0
        %v1225 = vpop.f32.mrf.mxu0
        %v1226 = vadd.f32 0.0, %v1225
        %v1227 = vpop.f32.mrf.mxu0
        %1228 = vmatprep.mubr.bf16.mxu0 0
        %1229 = vmatmul.mubr.bf16.gmra.mxu0 %v1133
        %v1230 = vpop.f32.mrf.mxu0
        %v1231 = vadd.f32 0.0, %v1230
        %v1232 = vpop.f32.mrf.mxu0
        %v1233 = vpop.f32.mrf.mxu0
        %v1234 = vadd.f32 0.0, %v1233
        %v1235 = vpop.f32.mrf.mxu0
        %1236 = vmatprep.mubr.bf16.mxu0 0
        %1237 = vmatmul.mubr.bf16.gmra.mxu0 %v1135
        %v1238 = vpop.f32.mrf.mxu0
        %v1239 = vadd.f32 0.0, %v1238
        %v1240 = vpop.f32.mrf.mxu0
        %v1241 = vpop.f32.mrf.mxu0
        %v1242 = vadd.f32 0.0, %v1241
        %v1243 = vpop.f32.mrf.mxu0
        %1244 = vmatprep.mubr.bf16.mxu0 0
        %1245 = vmatmul.mubr.bf16.gmra.mxu0 %v1137
        %v1246 = vpop.f32.mrf.mxu0
        %v1247 = vadd.f32 0.0, %v1246
        %v1248 = vpop.f32.mrf.mxu0
        %v1249 = vpop.f32.mrf.mxu0
        %v1250 = vadd.f32 0.0, %v1249
        %v1251 = vpop.f32.mrf.mxu0
        %1252 = vmatprep.mubr.bf16.mxu0 0
        %1253 = vmatmul.mubr.bf16.gmra.mxu0 %v1139
        %v1254 = vpop.f32.mrf.mxu0
        %v1255 = vadd.f32 0.0, %v1254
        %v1256 = vpop.f32.mrf.mxu0
        %v1257 = vpop.f32.mrf.mxu0
        %v1258 = vadd.f32 0.0, %v1257
        %v1259 = vpop.f32.mrf.mxu0
        %1260 = vmatprep.mubr.bf16.mxu0 0
        %1261 = vmatmul.mubr.bf16.gmra.mxu0 %v1141
        %v1262 = vpop.f32.mrf.mxu0
        %v1263 = vadd.f32 0.0, %v1262
        %v1264 = vpop.f32.mrf.mxu0
        %v1265 = vpop.f32.mrf.mxu0
        %v1266 = vadd.f32 0.0, %v1265
        %v1267 = vpop.f32.mrf.mxu0
        %1268 = vmatprep.mubr.bf16.mxu0 0
        %1269 = vmatmul.mubr.bf16.gmra.mxu0 %v1143
        %v1270 = vpop.f32.mrf.mxu0
        %v1271 = vadd.f32 0.0, %v1270
        %v1272 = vpop.f32.mrf.mxu0
        %v1273 = vpop.f32.mrf.mxu0
        %v1274 = vadd.f32 0.0, %v1273
        %v1275 = vpop.f32.mrf.mxu0
        %1276 = vmatprep.mubr.bf16.mxu0 0
        %1277 = vmatmul.mubr.bf16.gmra.mxu0 %v1145
        %v1278 = vpop.f32.mrf.mxu0
        %v1279 = vadd.f32 0.0, %v1278
        %v1280 = vpop.f32.mrf.mxu0
        %v1281 = vpop.f32.mrf.mxu0
        %v1282 = vadd.f32 0.0, %v1281
        %v1283 = vpop.f32.mrf.mxu0
        %1284 = vmatprep.mubr.bf16.mxu0 0
        %1285 = vmatmul.mubr.bf16.gmra.mxu0 %v1147
        %v1286 = vpop.f32.mrf.mxu0
        %v1287 = vadd.f32 0.0, %v1286
        %v1288 = vpop.f32.mrf.mxu0
        %v1289 = vpop.f32.mrf.mxu0
        %v1290 = vadd.f32 0.0, %v1289
        %v1291 = vpop.f32.mrf.mxu0
        %1292 = vmatprep.mubr.bf16.mxu0 0
        %1293 = vmatmul.mubr.bf16.gmra.mxu0 %v1149
        %v1294 = vpop.f32.mrf.mxu0
        %v1295 = vadd.f32 0.0, %v1294
        %v1296 = vpop.f32.mrf.mxu0
        %v1297 = vpop.f32.mrf.mxu0
        %v1298 = vadd.f32 0.0, %v1297
        %v1299 = vpop.f32.mrf.mxu0
        %1300 = vmatprep.mubr.bf16.mxu0 0
        %1301 = vmatmul.mubr.bf16.gmra.mxu0 %v1151
        %v1302 = vpop.f32.mrf.mxu0
        %v1303 = vadd.f32 0.0, %v1302
        %v1304 = vpop.f32.mrf.mxu0
        %v1305 = vpop.f32.mrf.mxu0
        %v1306 = vadd.f32 0.0, %v1305
        %v1307 = vpop.f32.mrf.mxu0
        %1308 = vmatprep.mubr.bf16.mxu0 0
        %1309 = vmatmul.mubr.bf16.gmra.mxu0 %v1153
        %v1310 = vpop.f32.mrf.mxu0
        %v1311 = vadd.f32 0.0, %v1310
        %v1312 = vpop.f32.mrf.mxu0
        %v1313 = vpop.f32.mrf.mxu0
        %v1314 = vadd.f32 0.0, %v1313
        %v1315 = vpop.f32.mrf.mxu0
        %1316 = vmatprep.mubr.bf16.mxu0 0
        %1317 = vmatmul.mubr.bf16.gmra.mxu0 %v1155
        %v1318 = vpop.f32.mrf.mxu0
        %v1319 = vadd.f32 0.0, %v1318
        %v1320 = vpop.f32.mrf.mxu0
        %v1321 = vpop.f32.mrf.mxu0
        %v1322 = vadd.f32 0.0, %v1321
        %v1323 = vpop.f32.mrf.mxu0
        %1324 = vdwg.mxu0
        %v1327 = vunpack.c.l.b16 %v1071
        %v1328 = vunpack.c.l.b16 %v1072
        %v1329 = vpack.c.b16 %v1328, %v1327
        %v1330 = vsel %vm1124, %v1040, 0
        %v1332 = vsel %vm1124, %v1042, 0
        %v1335 = vand.u32 %v1329, %v1160
        %1337 = vmatprep.subr.bf16.mxu0 0
        %1338 = vmatpush1.bf16.msra.mxu0 0
        %1339 = vmatprep.subr.bf16.mxu0 0
        %1340 = vmatpush1.bf16.msra.mxu0 0
        %1341 = vmatprep.subr.bf16.mxu0 0
        %1342 = vmatpush1.bf16.msra.mxu0 0
        %1343 = vmatprep.subr.bf16.mxu0 0
        %1344 = vmatpush1.bf16.msra.mxu0 0
        %1345 = vmatprep.subr.bf16.mxu0 0
        %1346 = vmatpush1.bf16.msra.mxu0 0
        %1347 = vmatprep.subr.bf16.mxu0 0
        %1348 = vmatpush1.bf16.msra.mxu0 0
        %1349 = vmatprep.subr.bf16.mxu0 0
        %1350 = vmatpush1.bf16.msra.mxu0 0
        %1351 = vmatprep.subr.bf16.mxu0 0
        %1352 = vmatpush1.bf16.msra.mxu0 %v1335
        %1353 = vmatprep.subr.bf16.mxu0 0
        %1354 = vmatpush2.bf16.msra.mxu0 0
        %1355 = vmatprep.subr.bf16.mxu0 0
        %1356 = vmatpush2.bf16.msra.mxu0 0
        %1357 = vmatprep.subr.bf16.mxu0 0
        %1358 = vmatpush2.bf16.msra.mxu0 0
        %1359 = vmatprep.subr.bf16.mxu0 0
        %1360 = vmatpush2.bf16.msra.mxu0 0
        %1361 = vmatprep.subr.bf16.mxu0 0
        %1362 = vmatpush2.bf16.msra.mxu0 0
        %1363 = vmatprep.subr.bf16.mxu0 0
        %1364 = vmatpush2.bf16.msra.mxu0 0
        %1365 = vmatprep.subr.bf16.mxu0 0
        %1366 = vmatpush2.bf16.msra.mxu0 0
        %1367 = vmatprep.subr.bf16.mxu0 0
        %1368 = vmatpush2.bf16.msra.mxu0 0
        %1369 = vmatprep.mubr.bf16.mxu0 0
        %1370 = vmatmul.mubr.bf16.gmra.mxu0 %v1330
        %v1371 = vpop.f32.mrf.mxu0
        %v1372 = vadd.f32 %v1199, %v1371
        %v1373 = vpop.f32.mrf.mxu0
        %v1374 = vpop.f32.mrf.mxu0
        %v1375 = vadd.f32 %v1202, %v1374
        %v1376 = vpop.f32.mrf.mxu0
        %1377 = vmatprep.mubr.bf16.mxu0 0
        %1378 = vmatmul.mubr.bf16.gmra.mxu0 %v1332
        %v1379 = vpop.f32.mrf.mxu0
        %v1380 = vadd.f32 %v1207, %v1379
        %v1381 = vpop.f32.mrf.mxu0
        %v1382 = vpop.f32.mrf.mxu0
        %v1383 = vadd.f32 %v1210, %v1382
        %v1384 = vpop.f32.mrf.mxu0
        %1385 = vmatprep.mubr.bf16.mxu0 0
        %1386 = vmatmul.mubr.bf16.gmra.mxu0 %v1125
        %v1387 = vpop.f32.mrf.mxu0
        %v1388 = vadd.f32 %v1215, %v1387
        %v1389 = vpop.f32.mrf.mxu0
        %v1390 = vpop.f32.mrf.mxu0
        %v1391 = vadd.f32 %v1218, %v1390
        %v1392 = vpop.f32.mrf.mxu0
        %1393 = vmatprep.mubr.bf16.mxu0 0
        %1394 = vmatmul.mubr.bf16.gmra.mxu0 %v1127
        %v1395 = vpop.f32.mrf.mxu0
        %v1396 = vadd.f32 %v1223, %v1395
        %v1397 = vpop.f32.mrf.mxu0
        %v1398 = vpop.f32.mrf.mxu0
        %v1399 = vadd.f32 %v1226, %v1398
        %v1400 = vpop.f32.mrf.mxu0
        %1401 = vmatprep.mubr.bf16.mxu0 0
        %1402 = vmatmul.mubr.bf16.gmra.mxu0 %v1129
        %v1403 = vpop.f32.mrf.mxu0
        %v1404 = vadd.f32 %v1231, %v1403
        %v1405 = vpop.f32.mrf.mxu0
        %v1406 = vpop.f32.mrf.mxu0
        %v1407 = vadd.f32 %v1234, %v1406
        %v1408 = vpop.f32.mrf.mxu0
        %1409 = vmatprep.mubr.bf16.mxu0 0
        %1410 = vmatmul.mubr.bf16.gmra.mxu0 %v1131
        %v1411 = vpop.f32.mrf.mxu0
        %v1412 = vadd.f32 %v1239, %v1411
        %v1413 = vpop.f32.mrf.mxu0
        %v1414 = vpop.f32.mrf.mxu0
        %v1415 = vadd.f32 %v1242, %v1414
        %v1416 = vpop.f32.mrf.mxu0
        %1417 = vmatprep.mubr.bf16.mxu0 0
        %1418 = vmatmul.mubr.bf16.gmra.mxu0 %v1133
        %v1419 = vpop.f32.mrf.mxu0
        %v1420 = vadd.f32 %v1247, %v1419
        %v1421 = vpop.f32.mrf.mxu0
        %v1422 = vpop.f32.mrf.mxu0
        %v1423 = vadd.f32 %v1250, %v1422
        %v1424 = vpop.f32.mrf.mxu0
        %1425 = vmatprep.mubr.bf16.mxu0 0
        %1426 = vmatmul.mubr.bf16.gmra.mxu0 %v1135
        %v1427 = vpop.f32.mrf.mxu0
        %v1428 = vadd.f32 %v1255, %v1427
        %v1429 = vpop.f32.mrf.mxu0
        %v1430 = vpop.f32.mrf.mxu0
        %v1431 = vadd.f32 %v1258, %v1430
        %v1432 = vpop.f32.mrf.mxu0
        %1433 = vmatprep.mubr.bf16.mxu0 0
        %1434 = vmatmul.mubr.bf16.gmra.mxu0 %v1137
        %v1435 = vpop.f32.mrf.mxu0
        %v1436 = vadd.f32 %v1263, %v1435
        %v1437 = vpop.f32.mrf.mxu0
        %v1438 = vpop.f32.mrf.mxu0
        %v1439 = vadd.f32 %v1266, %v1438
        %v1440 = vpop.f32.mrf.mxu0
        %1441 = vmatprep.mubr.bf16.mxu0 0
        %1442 = vmatmul.mubr.bf16.gmra.mxu0 %v1139
        %v1443 = vpop.f32.mrf.mxu0
        %v1444 = vadd.f32 %v1271, %v1443
        %v1445 = vpop.f32.mrf.mxu0
        %v1446 = vpop.f32.mrf.mxu0
        %v1447 = vadd.f32 %v1274, %v1446
        %v1448 = vpop.f32.mrf.mxu0
        %1449 = vmatprep.mubr.bf16.mxu0 0
        %1450 = vmatmul.mubr.bf16.gmra.mxu0 %v1141
        %v1451 = vpop.f32.mrf.mxu0
        %v1452 = vadd.f32 %v1279, %v1451
        %v1453 = vpop.f32.mrf.mxu0
        %v1454 = vpop.f32.mrf.mxu0
        %v1455 = vadd.f32 %v1282, %v1454
        %v1456 = vpop.f32.mrf.mxu0
        %1457 = vmatprep.mubr.bf16.mxu0 0
        %1458 = vmatmul.mubr.bf16.gmra.mxu0 %v1143
        %v1459 = vpop.f32.mrf.mxu0
        %v1460 = vadd.f32 %v1287, %v1459
        %v1461 = vpop.f32.mrf.mxu0
        %v1462 = vpop.f32.mrf.mxu0
        %v1463 = vadd.f32 %v1290, %v1462
        %v1464 = vpop.f32.mrf.mxu0
        %1465 = vmatprep.mubr.bf16.mxu0 0
        %1466 = vmatmul.mubr.bf16.gmra.mxu0 %v1145
        %v1467 = vpop.f32.mrf.mxu0
        %v1468 = vadd.f32 %v1295, %v1467
        %v1469 = vpop.f32.mrf.mxu0
        %v1470 = vpop.f32.mrf.mxu0
        %v1471 = vadd.f32 %v1298, %v1470
        %v1472 = vpop.f32.mrf.mxu0
        %1473 = vmatprep.mubr.bf16.mxu0 0
        %1474 = vmatmul.mubr.bf16.gmra.mxu0 %v1147
        %v1475 = vpop.f32.mrf.mxu0
        %v1476 = vadd.f32 %v1303, %v1475
        %v1477 = vpop.f32.mrf.mxu0
        %v1478 = vpop.f32.mrf.mxu0
        %v1479 = vadd.f32 %v1306, %v1478
        %v1480 = vpop.f32.mrf.mxu0
        %1481 = vmatprep.mubr.bf16.mxu0 0
        %1482 = vmatmul.mubr.bf16.gmra.mxu0 %v1149
        %v1483 = vpop.f32.mrf.mxu0
        %v1484 = vadd.f32 %v1311, %v1483
        %v1485 = vpop.f32.mrf.mxu0
        %v1486 = vpop.f32.mrf.mxu0
        %v1487 = vadd.f32 %v1314, %v1486
        %v1488 = vpop.f32.mrf.mxu0
        %1489 = vmatprep.mubr.bf16.mxu0 0
        %1490 = vmatmul.mubr.bf16.gmra.mxu0 %v1151
        %v1491 = vpop.f32.mrf.mxu0
        %v1492 = vadd.f32 %v1319, %v1491
        %v1493 = vpop.f32.mrf.mxu0
        %v1494 = vpop.f32.mrf.mxu0
        %v1495 = vadd.f32 %v1322, %v1494
        %v1496 = vpop.f32.mrf.mxu0
        %1497 = vdwg.mxu0
        %v1499 = vshrl.u32 %v712, 16
        %v1501 = vshll.u32 %v712, 16
        %v1503 = vrot.slane %v1501, 1
        %v1504 = vor.u32 %v1499, %v1503
        %v1506 = vshll.u32 %v680, 16
        %v1508 = vrot.slane %v1506, 1
        %v1509 = vsel %vm723, %v1504, %v1508
        %v1510 = vshrl.u32 %v680, 16
        %v1512 = vor.u32 %v1510, %v1508
        %v1514 = vshll.u32 %v722, 16
        %v1516 = vrot.slane %v1514, 1
        %v1517 = vsel %vm723, %v1512, %v1516
        %1518 = vrot.lane.b32.xlu0 %v1509, 3
        %v1519 = vpop.permute.xlu0 %1518
        %1520 = vrot.lane.b32.xlu0 %v1517, 3
        %v1521 = vpop.permute.xlu0 %1520
        %v1524 = vrot.slane %v712, 1
        %v1525 = vrot.slane %v680, 1
        %v1526 = vsel %vm932, %v1524, %v1525
        %v1527 = vrot.slane %v722, 1
        %v1528 = vsel %vm932, %v1525, %v1527
        %1529 = vrot.lane.b32.xlu0 %v1526, 6
        %v1530 = vpop.permute.xlu0 %1529
        %1531 = vrot.lane.b32.xlu0 %v1528, 6
        %v1532 = vpop.permute.xlu0 %1531
        %v1534 = vsel %vm1005, %v712, %v1519
        %v1536 = vsel %vm1005, %v680, %v1521
        %v1538 = vsel %vm1038, %v1534, %v1530
        %v1540 = vsel %vm1038, %v1536, %v1532
        %s1541 = scalar_lea.vmem %s3, 16
        %v1542 = vld [vmem:[%s1541] sm:$0xf]
        %v1543 = vld [vmem:[%s1541 + $0x4] sm:$0x1]
        %v1546 = vunpack.c.l.b16 %v1542
        %v1547 = vunpack.c.l.b16 %v1543
        %v1548 = vpack.c.b16 %v1547, %v1546
        %v1549 = vsel %vm1124, %v1538, 0
        %v1551 = vsel %vm1124, %v1540, 0
        %v1554 = vand.u32 %v1548, %v1160
        %1556 = vmatprep.subr.bf16.mxu0 0
        %1557 = vmatpush1.bf16.msra.mxu0 0
        %1558 = vmatprep.subr.bf16.mxu0 0
        %1559 = vmatpush1.bf16.msra.mxu0 0
        %1560 = vmatprep.subr.bf16.mxu0 0
        %1561 = vmatpush1.bf16.msra.mxu0 0
        %1562 = vmatprep.subr.bf16.mxu0 0
        %1563 = vmatpush1.bf16.msra.mxu0 0
        %1564 = vmatprep.subr.bf16.mxu0 0
        %1565 = vmatpush1.bf16.msra.mxu0 0
        %1566 = vmatprep.subr.bf16.mxu0 0
        %1567 = vmatpush1.bf16.msra.mxu0 0
        %1568 = vmatprep.subr.bf16.mxu0 0
        %1569 = vmatpush1.bf16.msra.mxu0 0
        %1570 = vmatprep.subr.bf16.mxu0 0
        %1571 = vmatpush1.bf16.msra.mxu0 %v1554
        %1572 = vmatprep.subr.bf16.mxu0 0
        %1573 = vmatpush2.bf16.msra.mxu0 0
        %1574 = vmatprep.subr.bf16.mxu0 0
        %1575 = vmatpush2.bf16.msra.mxu0 0
        %1576 = vmatprep.subr.bf16.mxu0 0
        %1577 = vmatpush2.bf16.msra.mxu0 0
        %1578 = vmatprep.subr.bf16.mxu0 0
        %1579 = vmatpush2.bf16.msra.mxu0 0
        %1580 = vmatprep.subr.bf16.mxu0 0
        %1581 = vmatpush2.bf16.msra.mxu0 0
        %1582 = vmatprep.subr.bf16.mxu0 0
        %1583 = vmatpush2.bf16.msra.mxu0 0
        %1584 = vmatprep.subr.bf16.mxu0 0
        %1585 = vmatpush2.bf16.msra.mxu0 0
        %1586 = vmatprep.subr.bf16.mxu0 0
        %1587 = vmatpush2.bf16.msra.mxu0 0
        %1588 = vmatprep.mubr.bf16.mxu0 0
        %1589 = vmatmul.mubr.bf16.gmra.mxu0 %v1129
        %v1590 = vpop.f32.mrf.mxu0
        %v1591 = vadd.f32 0.0, %v1590
        %v1592 = vpop.f32.mrf.mxu0
        %v1593 = vpop.f32.mrf.mxu0
        %v1594 = vadd.f32 0.0, %v1593
        %v1595 = vpop.f32.mrf.mxu0
        %1596 = vmatprep.mubr.bf16.mxu0 0
        %1597 = vmatmul.mubr.bf16.gmra.mxu0 %v1131
        %v1598 = vpop.f32.mrf.mxu0
        %v1599 = vadd.f32 0.0, %v1598
        %v1600 = vpop.f32.mrf.mxu0
        %v1601 = vpop.f32.mrf.mxu0
        %v1602 = vadd.f32 0.0, %v1601
        %v1603 = vpop.f32.mrf.mxu0
        %1604 = vmatprep.mubr.bf16.mxu0 0
        %1605 = vmatmul.mubr.bf16.gmra.mxu0 %v1133
        %v1606 = vpop.f32.mrf.mxu0
        %v1607 = vadd.f32 0.0, %v1606
        %v1608 = vpop.f32.mrf.mxu0
        %v1609 = vpop.f32.mrf.mxu0
        %v1610 = vadd.f32 0.0, %v1609
        %v1611 = vpop.f32.mrf.mxu0
        %1612 = vmatprep.mubr.bf16.mxu0 0
        %1613 = vmatmul.mubr.bf16.gmra.mxu0 %v1135
        %v1614 = vpop.f32.mrf.mxu0
        %v1615 = vadd.f32 0.0, %v1614
        %v1616 = vpop.f32.mrf.mxu0
        %v1617 = vpop.f32.mrf.mxu0
        %v1618 = vadd.f32 0.0, %v1617
        %v1619 = vpop.f32.mrf.mxu0
        %1620 = vmatprep.mubr.bf16.mxu0 0
        %1621 = vmatmul.mubr.bf16.gmra.mxu0 %v1137
        %v1622 = vpop.f32.mrf.mxu0
        %v1623 = vadd.f32 0.0, %v1622
        %v1624 = vpop.f32.mrf.mxu0
        %v1625 = vpop.f32.mrf.mxu0
        %v1626 = vadd.f32 0.0, %v1625
        %v1627 = vpop.f32.mrf.mxu0
        %1628 = vmatprep.mubr.bf16.mxu0 0
        %1629 = vmatmul.mubr.bf16.gmra.mxu0 %v1139
        %v1630 = vpop.f32.mrf.mxu0
        %v1631 = vadd.f32 0.0, %v1630
        %v1632 = vpop.f32.mrf.mxu0
        %v1633 = vpop.f32.mrf.mxu0
        %v1634 = vadd.f32 0.0, %v1633
        %v1635 = vpop.f32.mrf.mxu0
        %1636 = vmatprep.mubr.bf16.mxu0 0
        %1637 = vmatmul.mubr.bf16.gmra.mxu0 %v1141
        %v1638 = vpop.f32.mrf.mxu0
        %v1639 = vadd.f32 0.0, %v1638
        %v1640 = vpop.f32.mrf.mxu0
        %v1641 = vpop.f32.mrf.mxu0
        %v1642 = vadd.f32 0.0, %v1641
        %v1643 = vpop.f32.mrf.mxu0
        %1644 = vmatprep.mubr.bf16.mxu0 0
        %1645 = vmatmul.mubr.bf16.gmra.mxu0 %v1143
        %v1646 = vpop.f32.mrf.mxu0
        %v1647 = vadd.f32 0.0, %v1646
        %v1648 = vpop.f32.mrf.mxu0
        %v1649 = vpop.f32.mrf.mxu0
        %v1650 = vadd.f32 0.0, %v1649
        %v1651 = vpop.f32.mrf.mxu0
        %1652 = vmatprep.mubr.bf16.mxu0 0
        %1653 = vmatmul.mubr.bf16.gmra.mxu0 %v1145
        %v1654 = vpop.f32.mrf.mxu0
        %v1655 = vadd.f32 0.0, %v1654
        %v1656 = vpop.f32.mrf.mxu0
        %v1657 = vpop.f32.mrf.mxu0
        %v1658 = vadd.f32 0.0, %v1657
        %v1659 = vpop.f32.mrf.mxu0
        %1660 = vmatprep.mubr.bf16.mxu0 0
        %1661 = vmatmul.mubr.bf16.gmra.mxu0 %v1147
        %v1662 = vpop.f32.mrf.mxu0
        %v1663 = vadd.f32 0.0, %v1662
        %v1664 = vpop.f32.mrf.mxu0
        %v1665 = vpop.f32.mrf.mxu0
        %v1666 = vadd.f32 0.0, %v1665
        %v1667 = vpop.f32.mrf.mxu0
        %1668 = vmatprep.mubr.bf16.mxu0 0
        %1669 = vmatmul.mubr.bf16.gmra.mxu0 %v1149
        %v1670 = vpop.f32.mrf.mxu0
        %v1671 = vadd.f32 0.0, %v1670
        %v1672 = vpop.f32.mrf.mxu0
        %v1673 = vpop.f32.mrf.mxu0
        %v1674 = vadd.f32 0.0, %v1673
        %v1675 = vpop.f32.mrf.mxu0
        %1676 = vmatprep.mubr.bf16.mxu0 0
        %1677 = vmatmul.mubr.bf16.gmra.mxu0 %v1151
        %v1678 = vpop.f32.mrf.mxu0
        %v1679 = vadd.f32 0.0, %v1678
        %v1680 = vpop.f32.mrf.mxu0
        %v1681 = vpop.f32.mrf.mxu0
        %v1682 = vadd.f32 0.0, %v1681
        %v1683 = vpop.f32.mrf.mxu0
        %1684 = vmatprep.mubr.bf16.mxu0 0
        %1685 = vmatmul.mubr.bf16.gmra.mxu0 %v1153
        %v1686 = vpop.f32.mrf.mxu0
        %v1687 = vadd.f32 0.0, %v1686
        %v1688 = vpop.f32.mrf.mxu0
        %v1689 = vpop.f32.mrf.mxu0
        %v1690 = vadd.f32 0.0, %v1689
        %v1691 = vpop.f32.mrf.mxu0
        %1692 = vmatprep.mubr.bf16.mxu0 0
        %1693 = vmatmul.mubr.bf16.gmra.mxu0 %v1155
        %v1694 = vpop.f32.mrf.mxu0
        %v1695 = vadd.f32 0.0, %v1694
        %v1696 = vpop.f32.mrf.mxu0
        %v1697 = vpop.f32.mrf.mxu0
        %v1698 = vadd.f32 0.0, %v1697
        %v1699 = vpop.f32.mrf.mxu0
        %1700 = vmatprep.mubr.bf16.mxu0 0
        %1701 = vmatmul.mubr.bf16.gmra.mxu0 %v1549
        %v1702 = vpop.f32.mrf.mxu0
        %v1703 = vadd.f32 0.0, %v1702
        %v1704 = vpop.f32.mrf.mxu0
        %v1705 = vpop.f32.mrf.mxu0
        %v1706 = vadd.f32 0.0, %v1705
        %v1707 = vpop.f32.mrf.mxu0
        %1708 = vmatprep.mubr.bf16.mxu0 0
        %1709 = vmatmul.mubr.bf16.gmra.mxu0 %v1551
        %v1710 = vpop.f32.mrf.mxu0
        %v1711 = vadd.f32 0.0, %v1710
        %v1712 = vpop.f32.mrf.mxu0
        %v1713 = vpop.f32.mrf.mxu0
        %v1714 = vadd.f32 0.0, %v1713
        %v1715 = vpop.f32.mrf.mxu0
        %1716 = vdwg.mxu0
        %v1717 = vadd.f32 %v1372, %v1591
        %v1718 = vadd.f32 %v1375, %v1594
        %v1719 = vadd.f32 %v1380, %v1599
        %v1720 = vadd.f32 %v1383, %v1602
        %v1721 = vadd.f32 %v1388, %v1607
        %v1722 = vadd.f32 %v1391, %v1610
        %v1723 = vadd.f32 %v1396, %v1615
        %v1724 = vadd.f32 %v1399, %v1618
        %v1725 = vadd.f32 %v1404, %v1623
        %v1726 = vadd.f32 %v1407, %v1626
        %v1727 = vadd.f32 %v1412, %v1631
        %v1728 = vadd.f32 %v1415, %v1634
        %v1729 = vadd.f32 %v1420, %v1639
        %v1730 = vadd.f32 %v1423, %v1642
        %v1731 = vadd.f32 %v1428, %v1647
        %v1732 = vadd.f32 %v1431, %v1650
        %v1733 = vadd.f32 %v1436, %v1655
        %v1734 = vadd.f32 %v1439, %v1658
        %v1735 = vadd.f32 %v1444, %v1663
        %v1736 = vadd.f32 %v1447, %v1666
        %v1737 = vadd.f32 %v1452, %v1671
        %v1738 = vadd.f32 %v1455, %v1674
        %v1739 = vadd.f32 %v1460, %v1679
        %v1740 = vadd.f32 %v1463, %v1682
        %v1741 = vadd.f32 %v1468, %v1687
        %v1742 = vadd.f32 %v1471, %v1690
        %v1743 = vadd.f32 %v1476, %v1695
        %v1744 = vadd.f32 %v1479, %v1698
        %v1745 = vadd.f32 %v1484, %v1703
        %v1746 = vadd.f32 %v1487, %v1706
        %v1747 = vadd.f32 %v1492, %v1711
        %v1748 = vadd.f32 %v1495, %v1714
        %v1749 = vld [vmem:[%s4] sm:$0x1]
        %v1751 = vlaneseq
        %v1752 = vshrl.u32 %v1751, 7
        %v1753 = vsub.s32 0, %v1752
        %v1754 = vrot.slane %v1749, %v1753
        %v1756 = vadd.f32 %v1717, %v1754
        %v1757 = vadd.f32 %v1718, %v1754
        %v1758 = vadd.f32 %v1719, %v1754
        %v1759 = vadd.f32 %v1720, %v1754
        %v1760 = vadd.f32 %v1721, %v1754
        %v1761 = vadd.f32 %v1722, %v1754
        %v1762 = vadd.f32 %v1723, %v1754
        %v1763 = vadd.f32 %v1724, %v1754
        %v1764 = vadd.f32 %v1725, %v1754
        %v1765 = vadd.f32 %v1726, %v1754
        %v1766 = vadd.f32 %v1727, %v1754
        %v1767 = vadd.f32 %v1728, %v1754
        %v1768 = vadd.f32 %v1729, %v1754
        %v1769 = vadd.f32 %v1730, %v1754
        %v1770 = vadd.f32 %v1731, %v1754
        %v1771 = vadd.f32 %v1732, %v1754
        %v1772 = vadd.f32 %v1733, %v1754
        %v1773 = vadd.f32 %v1734, %v1754
        %v1774 = vadd.f32 %v1735, %v1754
        %v1775 = vadd.f32 %v1736, %v1754
        %v1776 = vadd.f32 %v1737, %v1754
        %v1777 = vadd.f32 %v1738, %v1754
        %v1778 = vadd.f32 %v1739, %v1754
        %v1779 = vadd.f32 %v1740, %v1754
        %v1780 = vadd.f32 %v1741, %v1754
        %v1781 = vadd.f32 %v1742, %v1754
        %v1782 = vadd.f32 %v1743, %v1754
        %v1783 = vadd.f32 %v1744, %v1754
        %v1784 = vadd.f32 %v1745, %v1754
        %v1785 = vadd.f32 %v1746, %v1754
        %v1786 = vadd.f32 %v1747, %v1754
        %v1787 = vadd.f32 %v1748, %v1754
        %v1788 = vmax.f32 %v1756, 0.0
        %v1789 = vmax.f32 %v1757, 0.0
        %v1790 = vmax.f32 %v1758, 0.0
        %v1791 = vmax.f32 %v1759, 0.0
        %v1792 = vmax.f32 %v1760, 0.0
        %v1793 = vmax.f32 %v1761, 0.0
        %v1794 = vmax.f32 %v1762, 0.0
        %v1795 = vmax.f32 %v1763, 0.0
        %v1796 = vmax.f32 %v1764, 0.0
        %v1797 = vmax.f32 %v1765, 0.0
        %v1798 = vmax.f32 %v1766, 0.0
        %v1799 = vmax.f32 %v1767, 0.0
        %v1800 = vmax.f32 %v1768, 0.0
        %v1801 = vmax.f32 %v1769, 0.0
        %v1802 = vmax.f32 %v1770, 0.0
        %v1803 = vmax.f32 %v1771, 0.0
        %v1804 = vmax.f32 %v1772, 0.0
        %v1805 = vmax.f32 %v1773, 0.0
        %v1806 = vmax.f32 %v1774, 0.0
        %v1807 = vmax.f32 %v1775, 0.0
        %v1808 = vmax.f32 %v1776, 0.0
        %v1809 = vmax.f32 %v1777, 0.0
        %v1810 = vmax.f32 %v1778, 0.0
        %v1811 = vmax.f32 %v1779, 0.0
        %v1812 = vmax.f32 %v1780, 0.0
        %v1813 = vmax.f32 %v1781, 0.0
        %v1814 = vmax.f32 %v1782, 0.0
        %v1815 = vmax.f32 %v1783, 0.0
        %v1816 = vmax.f32 %v1784, 0.0
        %v1817 = vmax.f32 %v1785, 0.0
        %v1818 = vmax.f32 %v1786, 0.0
        %v1819 = vmax.f32 %v1787, 0.0
        %v1820 = vpack.c.bf16 %v1789, %v1788
        %v1821 = vpack.c.bf16 %v1791, %v1790
        %v1822 = vpack.c.bf16 %v1793, %v1792
        %v1823 = vpack.c.bf16 %v1795, %v1794
        %v1824 = vpack.c.bf16 %v1797, %v1796
        %v1825 = vpack.c.bf16 %v1799, %v1798
        %v1826 = vpack.c.bf16 %v1801, %v1800
        %v1827 = vpack.c.bf16 %v1803, %v1802
        %v1828 = vpack.c.bf16 %v1805, %v1804
        %v1829 = vpack.c.bf16 %v1807, %v1806
        %v1830 = vpack.c.bf16 %v1809, %v1808
        %v1831 = vpack.c.bf16 %v1811, %v1810
        %v1832 = vpack.c.bf16 %v1813, %v1812
        %v1833 = vpack.c.bf16 %v1815, %v1814
        %v1834 = vpack.c.bf16 %v1817, %v1816
        %v1835 = vpack.c.bf16 %v1819, %v1818
        %v1852 = vunpack.c.l.b16 %v1820
        %v1853 = vunpack.c.h.b16 %v1820
        %v1854 = vunpack.c.l.b16 %v1821
        %v1855 = vunpack.c.h.b16 %v1821
        %v1856 = vunpack.c.l.b16 %v1822
        %v1857 = vunpack.c.h.b16 %v1822
        %v1858 = vunpack.c.l.b16 %v1823
        %v1859 = vunpack.c.h.b16 %v1823
        %v1860 = vunpack.c.l.b16 %v1824
        %v1861 = vunpack.c.h.b16 %v1824
        %v1862 = vunpack.c.l.b16 %v1825
        %v1863 = vunpack.c.h.b16 %v1825
        %v1864 = vunpack.c.l.b16 %v1826
        %v1865 = vunpack.c.h.b16 %v1826
        %v1866 = vunpack.c.l.b16 %v1827
        %v1867 = vunpack.c.h.b16 %v1827
        %v1868 = vunpack.c.l.b16 %v1828
        %v1869 = vunpack.c.h.b16 %v1828
        %v1870 = vunpack.c.l.b16 %v1829
        %v1871 = vunpack.c.h.b16 %v1829
        %v1872 = vunpack.c.l.b16 %v1830
        %v1873 = vunpack.c.h.b16 %v1830
        %v1874 = vunpack.c.l.b16 %v1831
        %v1875 = vunpack.c.h.b16 %v1831
        %v1876 = vunpack.c.l.b16 %v1832
        %v1877 = vunpack.c.h.b16 %v1832
        %v1878 = vunpack.c.l.b16 %v1833
        %v1879 = vunpack.c.h.b16 %v1833
        %v1880 = vunpack.c.l.b16 %v1834
        %v1881 = vunpack.c.h.b16 %v1834
        %v1882 = vunpack.c.l.b16 %v1835
        %v1883 = vunpack.c.h.b16 %v1835
        %v1884 = vpack.c.b16 %v1852, %v1852
        %v1885 = vpack.c.b16 %v1853, %v1853
        %v1886 = vpack.c.b16 %v1854, %v1854
        %v1887 = vpack.c.b16 %v1855, %v1855
        %v1888 = vpack.c.b16 %v1856, %v1856
        %v1889 = vpack.c.b16 %v1857, %v1857
        %v1890 = vpack.c.b16 %v1858, %v1858
        %v1891 = vpack.c.b16 %v1859, %v1859
        %v1892 = vpack.c.b16 %v1860, %v1860
        %v1893 = vpack.c.b16 %v1861, %v1861
        %v1894 = vpack.c.b16 %v1862, %v1862
        %v1895 = vpack.c.b16 %v1863, %v1863
        %v1896 = vpack.c.b16 %v1864, %v1864
        %v1897 = vpack.c.b16 %v1865, %v1865
        %v1898 = vpack.c.b16 %v1866, %v1866
        %v1899 = vpack.c.b16 %v1867, %v1867
        %v1900 = vpack.c.b16 %v1868, %v1868
        %v1901 = vpack.c.b16 %v1869, %v1869
        %v1902 = vpack.c.b16 %v1870, %v1870
        %v1903 = vpack.c.b16 %v1871, %v1871
        %v1904 = vpack.c.b16 %v1872, %v1872
        %v1905 = vpack.c.b16 %v1873, %v1873
        %v1906 = vpack.c.b16 %v1874, %v1874
        %v1907 = vpack.c.b16 %v1875, %v1875
        %v1908 = vpack.c.b16 %v1876, %v1876
        %v1909 = vpack.c.b16 %v1877, %v1877
        %v1910 = vpack.c.b16 %v1878, %v1878
        %v1911 = vpack.c.b16 %v1879, %v1879
        %v1912 = vpack.c.b16 %v1880, %v1880
        %v1913 = vpack.c.b16 %v1881, %v1881
        %v1914 = vpack.c.b16 %v1882, %v1882
        %v1915 = vpack.c.b16 %v1883, %v1883
        %vm1948 = vcmask 519168
        %1949 = vst.msk [vmem:[%s334] sm:$0xf] %vm1948, %v1884
        %1950 = vst.msk [vmem:[%s334 + $0x4] sm:$0xf] %vm1948, %v1885
        %1951 = vst.msk [vmem:[%s334 + $0x8] sm:$0xf] %vm1948, %v1886
        %1952 = vst.msk [vmem:[%s334 + $0xc] sm:$0xf] %vm1948, %v1887
        %1953 = vst.msk [vmem:[%s334 + $0x10] sm:$0xf] %vm1948, %v1888
        %1954 = vst.msk [vmem:[%s334 + $0x14] sm:$0xf] %vm1948, %v1889
        %1955 = vst.msk [vmem:[%s334 + $0x18] sm:$0xf] %vm1948, %v1890
        %1956 = vst.msk [vmem:[%s334 + $0x1c] sm:$0xf] %vm1948, %v1891
        %1957 = vst.msk [vmem:[%s334 + $0x20] sm:$0xf] %vm1948, %v1892
        %1958 = vst.msk [vmem:[%s334 + $0x24] sm:$0xf] %vm1948, %v1893
        %1959 = vst.msk [vmem:[%s334 + $0x28] sm:$0xf] %vm1948, %v1894
        %1960 = vst.msk [vmem:[%s334 + $0x2c] sm:$0xf] %vm1948, %v1895
        %1961 = vst.msk [vmem:[%s334 + $0x30] sm:$0xf] %vm1948, %v1896
        %1962 = vst.msk [vmem:[%s334 + $0x34] sm:$0xf] %vm1948, %v1897
        %1963 = vst.msk [vmem:[%s334 + $0x38] sm:$0xf] %vm1948, %v1898
        %1964 = vst.msk [vmem:[%s334 + $0x3c] sm:$0xf] %vm1948, %v1899
        %1965 = vst.msk [vmem:[%s334 + $0x40] sm:$0xf] %vm1948, %v1900
        %1966 = vst.msk [vmem:[%s334 + $0x44] sm:$0xf] %vm1948, %v1901
        %1967 = vst.msk [vmem:[%s334 + $0x48] sm:$0xf] %vm1948, %v1902
        %1968 = vst.msk [vmem:[%s334 + $0x4c] sm:$0xf] %vm1948, %v1903
        %1969 = vst.msk [vmem:[%s334 + $0x50] sm:$0xf] %vm1948, %v1904
        %1970 = vst.msk [vmem:[%s334 + $0x54] sm:$0xf] %vm1948, %v1905
        %1971 = vst.msk [vmem:[%s334 + $0x58] sm:$0xf] %vm1948, %v1906
        %1972 = vst.msk [vmem:[%s334 + $0x5c] sm:$0xf] %vm1948, %v1907
        %1973 = vst.msk [vmem:[%s334 + $0x60] sm:$0xf] %vm1948, %v1908
        %1974 = vst.msk [vmem:[%s334 + $0x64] sm:$0xf] %vm1948, %v1909
        %1975 = vst.msk [vmem:[%s334 + $0x68] sm:$0xf] %vm1948, %v1910
        %1976 = vst.msk [vmem:[%s334 + $0x6c] sm:$0xf] %vm1948, %v1911
        %1977 = vst.msk [vmem:[%s334 + $0x70] sm:$0xf] %vm1948, %v1912
        %1978 = vst.msk [vmem:[%s334 + $0x74] sm:$0xf] %vm1948, %v1913
        %1979 = vst.msk [vmem:[%s334 + $0x78] sm:$0xf] %vm1948, %v1914
        %1980 = vst.msk [vmem:[%s334 + $0x7c] sm:$0xf] %vm1948, %v1915
        %s1981 = sand.u32 %s183, 1
        %s1982 = scalar_lea.sflag [#allocation3], %s1981
        %s1983 = sand.u32 %s183, 1
        %s1984 = smul.addr %s1983, 128
        %s1985 = scalar_lea.vmem [#allocation2], %s1984
        // Predicated region
        $region41: #{tpu_custom_call.1} parent=39 // pred_check
          %p1986 = pneg %p193
        $region42: #{tpu_custom_call.1} parent=39 // pred_check_branch
          %1988 = sbr.rel (%p1986) target = $region44
        $region43: #{tpu_custom_call.1} parent=39 // pred_region
          %s1989 = smul.u32 8, %s24
          %s1991 = ssub.s32 2048, 2048
          %1992 = vsyncadd %s1982, %s1991
          %s1993 = smul.addr %s1989, 4
          %s1994 = smul.addr %s23, 128
          %s1995 = sadd.s32 %s1993, %s1994
          %s1996 = smul.addr %s1995, 64
          %s1997 = scalar_lea.hbm %s5, %s1996
          %s1998 = sshll.u32 %s1985, 4
          %s1999 = int_to_ptr.vmem [resolvable:$true] %s1998
          %2004 = dma.vmem_to_hbm [thread:$0]  %s1999, 2048, %s1997, %s1982, 64, 64, 4
        $region44: #{tpu_custom_call.1} parent=39 // pred_fallthru
          _
      $region40: #{tpu_custom_call.1} parent=5 // pred_fallthru
        _
      %p2005 = scmp.le.s32.totalorder 2, %s14
      // Predicated region
      $region45: #{tpu_custom_call.1} parent=5 // pred_check
        %p2006 = pneg %p2005
      $region46: #{tpu_custom_call.1} parent=5 // pred_check_branch
        %2008 = sbr.rel (%p2006) target = $region48
      $region47: #{tpu_custom_call.1} parent=5 // pred_region
        %s2009 = ssub.s32 %s14, 2
        // Predicated region
        $region49: #{tpu_custom_call.1} parent=47 // pred_check
          %p2010 = pneg %p199
        $region50: #{tpu_custom_call.1} parent=47 // pred_check_branch
          %2012 = sbr.rel (%p2010) target = $region52
        $region51: #{tpu_custom_call.1} parent=47 // pred_region
          %s2013 = sand.u32 %s184, 1
          %s2014 = scalar_lea.sflag [#allocation3], %s2013
          %s2015 = sand.u32 %s184, 1
          %s2016 = smul.addr %s2015, 128
          %s2017 = scalar_lea.vmem [#allocation2], %s2016
          %2018 = dma.done %s2014, 2048
        $region52: #{tpu_custom_call.1} parent=47 // pred_fallthru
          _
      $region48: #{tpu_custom_call.1} parent=5 // pred_fallthru
        _
    $region6: #{tpu_custom_call.1} parent=1 // loop_footer
      %s18 = sadd.s32 1, %s14
    $region7: #{tpu_custom_call.1} parent=1 // loop_footer_branch
      %13 = sbr.rel target = $region3
    $region8: #{tpu_custom_call.1} parent=1 // loop_exit
      _
    %2019 = vsyncpa [#allocation3], 1
    %s2020 = scalar_lea.sflag [#allocation3], 1
    %2021 = vsyncpa %s2020, 1

</llo_original>
